<compile_context>
chip_gen: v7x
topology: tpu7x:2x2x1
jax: 0.10.0
libtpu: 0.0.40
codegen_flags: <defaults>
</compile_context>

<pallas_src>
import functools

import jax
import jax.numpy as jnp
import numpy as np
from jax import lax
from jax.experimental import pallas as pl
from jax.experimental.pallas import tpu as pltpu

K = 7          # conv kernel size
PAD = 3        # spatial padding


def _round_up(v, m):
    return ((v + m - 1) // m) * m


def _spatial_attention_kernel(w_ref, col_ref, x_ref, o_ref, psum_ref, pmax_ref,
                              *, W, HW, Lpad, Rpad, block_c, num_cb,
                              tail_c, ragged):
    # w_ref    : SMEM (2*K*K,) f32 -- conv weight [in_ch, ky, kx]; the avg
    #                                 branch (in_ch 0) is pre-scaled by 1/C.
    # col_ref  : VMEM (1, HW) int32 -- column index (x coordinate) per pixel.
    # x_ref    : VMEM (1, block_c, HW) -- lane-dense input channel block.
    # o_ref    : VMEM (1, 1, HW)       -- lane-dense sigmoid attention map.
    # psum_ref : VMEM (1, Lpad+HW+Rpad) f32 -- padded running channel sum.
    # pmax_ref : VMEM (1, Lpad+HW+Rpad) f32 -- padded running channel max.
    c = pl.program_id(1)
    interior = (slice(None), pl.ds(Lpad, HW))

    def pooled(mask_tail):
        xb = x_ref[0].astype(jnp.float32)                 # (block_c, HW)
        if mask_tail:
            # Last ragged block: the BlockSpec read past the end of the C
            # axis returns padded garbage; jnp.where keeps it out of the
            # reduction (including NaN garbage).
            ch = lax.broadcasted_iota(jnp.int32, (block_c, HW), 0)
            valid = ch < tail_c
            s = jnp.sum(jnp.where(valid, xb, 0.0), axis=0, keepdims=True)
            m = jnp.max(jnp.where(valid, xb, -jnp.inf), axis=0, keepdims=True)
        else:
            s = jnp.sum(xb, axis=0, keepdims=True)
            m = jnp.max(xb, axis=0, keepdims=True)
        return s, m

    def initialize(s, m):
        # Zero only the padding borders; interior gets the first block's maps.
        zl = jnp.zeros((1, Lpad), jnp.float32)
        zr = jnp.zeros((1, Rpad), jnp.float32)
        psum_ref[:, pl.ds(0, Lpad)] = zl
        psum_ref[:, pl.ds(Lpad + HW, Rpad)] = zr
        pmax_ref[:, pl.ds(0, Lpad)] = zl
        pmax_ref[:, pl.ds(Lpad + HW, Rpad)] = zr
        psum_ref[interior] = s
        pmax_ref[interior] = m

    def accumulate(s, m):
        psum_ref[interior] = psum_ref[interior] + s
        pmax_ref[interior] = jnp.maximum(pmax_ref[interior], m)

    def finish():
        col = col_ref[...]                                # (1, HW) int32
        acc = jnp.zeros((1, HW), jnp.float32)
        # 7 dx groups x {sum, max} accumulators = 14 independent chains of
        # length 7, then a short combine -- avoids one long serial chain.
        for dx in range(-PAD, PAD + 1):
            kx = dx + PAD
            acc_s = jnp.zeros((1, HW), jnp.float32)
            acc_m = jnp.zeros((1, HW), jnp.float32)
            for ky in range(K):
                dy = ky - PAD
                off = Lpad + dy * W + dx                  # static lane offset
                acc_s = acc_s + w_ref[ky * K + kx] * psum_ref[:, pl.ds(off, HW)]
                acc_m = acc_m + w_ref[K * K + ky * K + kx] * pmax_ref[:, pl.ds(off, HW)]
            g = acc_s + acc_m
            # Mask pixels whose x+dx falls outside [0, W): this is exactly the
            # left/right zero padding of the 2-D conv (top/bottom padding is
            # the zero border of the flat buffer).
            if dx < 0:
                g = jnp.where(col >= -dx, g, 0.0)
            elif dx > 0:
                g = jnp.where(col < W - dx, g, 0.0)
            acc = acc + g
        o_ref[0] = jax.nn.sigmoid(acc).astype(o_ref.dtype)

    if not ragged:
        s, m = pooled(False)

        @pl.when(c == 0)
        def _():
            initialize(s, m)

        @pl.when(c != 0)
        def _():
            accumulate(s, m)

        @pl.when(c == num_cb - 1)
        def _():
            finish()
    else:
        # Ragged tail: mask only inside the last-channel-block branch so the
        # hot reduction path stays mask-free.  (ragged => num_cb >= 2.)
        @pl.when(c == 0)
        def _():
            s, m = pooled(False)
            initialize(s, m)

        @pl.when((c != 0) & (c != num_cb - 1))
        def _():
            s, m = pooled(False)
            accumulate(s, m)

        @pl.when(c == num_cb - 1)
        def _():
            s, m = pooled(True)
            accumulate(s, m)
            finish()


def spatial_attention(x, weight, *, per_buf_budget_bytes=8 * 1024 * 1024,
                      vmem_limit_bytes=40 * 1024 * 1024):
    """x: (N, C, H, W); weight: (1, 2, 7, 7) -> (N, 1, H, W) sigmoid map."""
    N, C, H, W = x.shape
    HW = H * W
    itemsize = jnp.dtype(x.dtype).itemsize

    # Padded flat pooled-map geometry.  Lpad is a multiple of 128 (>= 3W+3)
    # so the per-step accumulation region [Lpad, Lpad+HW) starts lane-aligned.
    Lpad = _round_up(PAD * W + PAD, 128)
    Rpad = _round_up(PAD * W + PAD, 128)
    padded_len = Lpad + HW + Rpad

    # --- channel tile selection (padding-aware VMEM math) -------------------
    # Real VMEM tile bytes per channel row = round_up(HW, 128) lanes, and the
    # channel dim rounds up to the sublane packing (8 f32 / 16 bf16 / 32 i8).
    sub = {4: 8, 2: 16, 1: 32}.get(itemsize, 8)
    lane_hw = _round_up(HW, 128)
    bytes_per_channel = lane_hw * itemsize
    rows = max(1, per_buf_budget_bytes // bytes_per_channel)
    if C <= rows:
        block_c = C                       # single block, full C extent
        ragged = False
    else:
        max_bc = max(sub, (rows // sub) * sub)
        block_c = 0
        d = max_bc
        while d >= sub:                   # largest multiple-of-sub divisor
            if C % d == 0:
                block_c = d
                break
            d -= sub
        if block_c >= max(sub, max_bc // 4):
            ragged = False                # exact divisor: no mask anywhere
        else:
            block_c = max_bc              # ragged tail, masked in last block
            ragged = True
    num_cb = int(pl.cdiv(C, block_c))
    tail_c = C - (num_cb - 1) * block_c

    # Lane-dense input / output layout (free reshape for contiguous NCHW).
    x_flat = x.reshape(N, C, HW)
    col_ids = jnp.tile(jnp.arange(W, dtype=jnp.int32), H).reshape(1, HW)

    # Fold 1/C into the avg-branch weights: kernel accumulates a channel sum.
    w = weight.astype(jnp.float32)
    w_flat = jnp.concatenate(
        [(w[0, 0] / float(C)).reshape(-1), w[0, 1].reshape(-1)])   # (2*K*K,)

    kernel = functools.partial(
        _spatial_attention_kernel, W=W, HW=HW, Lpad=Lpad, Rpad=Rpad,
        block_c=block_c, num_cb=num_cb, tail_c=tail_c, ragged=ragged)

    cost = pl.CostEstimate(
        flops=2 * N * C * HW + N * HW * (4 * K * K + 8),
        transcendentals=N * HW,
        bytes_accessed=(x.size * itemsize + N * HW * itemsize
                        + HW * 4 + 2 * K * K * 4))

    # TODO(synk): for v7x small-batch (N=1) inference, add a second parallel
    # grid axis over H-slabs (3-row halo) so both TensorCores are used.
    out_flat = pl.pallas_call(
        kernel,
        out_shape=jax.ShapeDtypeStruct((N, 1, HW), x.dtype),
        grid=(N, num_cb),
        in_specs=[
            pl.BlockSpec(memory_space=pltpu.MemorySpace.SMEM),        # weights
            pl.BlockSpec((1, HW), lambda n, c: (0, 0)),               # col ids
            pl.BlockSpec((1, block_c, HW), lambda n, c: (n, c, 0)),   # x block
        ],
        out_specs=pl.BlockSpec((1, 1, HW), lambda n, c: (n, 0, 0)),
        scratch_shapes=[
            pltpu.VMEM((1, padded_len), jnp.float32),  # padded running sum
            pltpu.VMEM((1, padded_len), jnp.float32),  # padded running max
        ],
        compiler_params=pltpu.CompilerParams(
            dimension_semantics=("parallel", "arbitrary"),
            vmem_limit_bytes=vmem_limit_bytes),
        cost_estimate=cost,
    )(w_flat, col_ids, x_flat)

    return out_flat.reshape(N, 1, H, W)


def _reference(x, weight):
    x_avg = jnp.mean(x, axis=1, keepdims=True)
    x_max = jnp.max(x, axis=1, keepdims=True)
    feat = jnp.concatenate([x_avg, x_max], axis=1)          # (N, 2, H, W)
    out = lax.conv_general_dilated(
        feat, weight, window_strides=(1, 1),
        padding=((PAD, PAD), (PAD, PAD)),
        dimension_numbers=("NCHW", "OIHW", "NCHW"))
    return jax.nn.sigmoid(out)


if __name__ == "__main__":
    key = jax.random.PRNGKey(0)
    kx_, kw_ = jax.random.split(key)

    # Small shapes consistent with the module (any C, H, W work).
    N, C, H, W = 2, 4, 16, 16
    x = jax.random.normal(kx_, (N, C, H, W), dtype=jnp.float32)

    # Deterministic synthetic conv weight: Conv2d(2, 1, 7, bias=False) -> (1,2,7,7)
    weight = 0.05 * jax.random.normal(kw_, (1, 2, K, K), dtype=jnp.float32)

    out = spatial_attention(x, weight)
    out = jax.block_until_ready(out)

    ref = _reference(x, weight)
    assert out.shape == (N, 1, H, W)
    np.testing.assert_allclose(np.asarray(out), np.asarray(ref),
                               rtol=1e-5, atol=1e-5)
    print("KERNEL_OK")
</pallas_src>

<mosaic_0001>
module attributes {stable_mosaic.version = 11 : i64} {
  func.func @_spatial_attention_kernel(%arg0: i32, %arg1: i32, %arg2: memref<98xf32, #tpu.memory_space<smem>>, %arg3: memref<1x256xi32, #tpu.memory_space<vmem>>, %arg4: memref<1x4x256xf32, #tpu.memory_space<vmem>>, %arg5: memref<1x1x256xf32, #tpu.memory_space<vmem>>, %arg6: memref<1x512xf32, #tpu.memory_space<vmem>>, %arg7: memref<1x512xf32, #tpu.memory_space<vmem>>) attributes {dimension_semantics = [#tpu.dimension_semantics<parallel>, #tpu.dimension_semantics<arbitrary>], iteration_bounds = array<i64: 2, 1>, scalar_prefetch = 0 : i64, scratch_operands = 2 : i64, tpu.core_type = #tpu.core_type<tc>, window_params = [{transform_indices = @transform_0, window_bounds = array<i64: 98>}, {pipeline_mode = #tpu.pipeline_mode<synchronous>, transform_indices = @transform_1, window_bounds = array<i64: 1, 256>}, {transform_indices = @transform_2, window_bounds = array<i64: 1, 4, 256>}, {transform_indices = @transform_3, window_bounds = array<i64: 1, 1, 256>}]} {
    %c0 = arith.constant 0 : index
    %c0_0 = arith.constant 0 : index
    %c0_1 = arith.constant 0 : index
    %0 = vector.load %arg4[%c0, %c0_0, %c0_1] : memref<1x4x256xf32, #tpu.memory_space<vmem>>, vector<1x4x256xf32>
    %1 = vector.shape_cast %0 : vector<1x4x256xf32> to vector<4x256xf32>
    %cst = arith.constant dense<0.000000e+00> : vector<256xf32>
    %2 = vector.multi_reduction <add>, %1, %cst [0] : vector<4x256xf32> to vector<256xf32>
    %3 = vector.shape_cast %2 : vector<256xf32> to vector<1x256xf32>
    %cst_2 = arith.constant dense<0xFF800000> : vector<256xf32>
    %4 = vector.multi_reduction <maximumf>, %1, %cst_2 [0] : vector<4x256xf32> to vector<256xf32>
    %5 = vector.shape_cast %4 : vector<256xf32> to vector<1x256xf32>
    %c0_i32 = arith.constant 0 : i32
    %6 = arith.cmpi eq, %arg1, %c0_i32 : i32
    %7 = arith.extui %6 : i1 to i32
    %c0_i32_3 = arith.constant 0 : i32
    %8 = arith.cmpi ne, %7, %c0_i32_3 : i32
    scf.if %8 {
      %cst_8 = arith.constant 0.000000e+00 : f32
      %15 = vector.broadcast %cst_8 : f32 to vector<1x128xf32>
      %cst_9 = arith.constant 0.000000e+00 : f32
      %16 = vector.broadcast %cst_9 : f32 to vector<1x128xf32>
      %c0_10 = arith.constant 0 : index
      %c0_11 = arith.constant 0 : index
      %17 = vector.load %arg6[%c0_10, %c0_11] : memref<1x512xf32, #tpu.memory_space<vmem>>, vector<1x128xf32>
      tpu.vector_store %arg6[%c0_10, %c0_11], %15 {strides = array<i32>} : memref<1x512xf32, #tpu.memory_space<vmem>>, vector<1x128xf32>,
      %c0_12 = arith.constant 0 : index
      %c384 = arith.constant 384 : index
      %18 = vector.load %arg6[%c0_12, %c384] : memref<1x512xf32, #tpu.memory_space<vmem>>, vector<1x128xf32>
      tpu.vector_store %arg6[%c0_12, %c384], %16 {strides = array<i32>} : memref<1x512xf32, #tpu.memory_space<vmem>>, vector<1x128xf32>,
      %c0_13 = arith.constant 0 : index
      %c0_14 = arith.constant 0 : index
      %19 = vector.load %arg7[%c0_13, %c0_14] : memref<1x512xf32, #tpu.memory_space<vmem>>, vector<1x128xf32>
      tpu.vector_store %arg7[%c0_13, %c0_14], %15 {strides = array<i32>} : memref<1x512xf32, #tpu.memory_space<vmem>>, vector<1x128xf32>,
      %c0_15 = arith.constant 0 : index
      %c384_16 = arith.constant 384 : index
      %20 = vector.load %arg7[%c0_15, %c384_16] : memref<1x512xf32, #tpu.memory_space<vmem>>, vector<1x128xf32>
      tpu.vector_store %arg7[%c0_15, %c384_16], %16 {strides = array<i32>} : memref<1x512xf32, #tpu.memory_space<vmem>>, vector<1x128xf32>,
      %c0_17 = arith.constant 0 : index
      %c128 = arith.constant 128 : index
      %21 = vector.load %arg6[%c0_17, %c128] : memref<1x512xf32, #tpu.memory_space<vmem>>, vector<1x256xf32>
      tpu.vector_store %arg6[%c0_17, %c128], %3 {strides = array<i32>} : memref<1x512xf32, #tpu.memory_space<vmem>>, vector<1x256xf32>,
      %c0_18 = arith.constant 0 : index
      %c128_19 = arith.constant 128 : index
      %22 = vector.load %arg7[%c0_18, %c128_19] : memref<1x512xf32, #tpu.memory_space<vmem>>, vector<1x256xf32>
      tpu.vector_store %arg7[%c0_18, %c128_19], %5 {strides = array<i32>} : memref<1x512xf32, #tpu.memory_space<vmem>>, vector<1x256xf32>,
    } else {
    }
    %c0_i32_4 = arith.constant 0 : i32
    %9 = arith.cmpi ne, %arg1, %c0_i32_4 : i32
    %10 = arith.extui %9 : i1 to i32
    %c0_i32_5 = arith.constant 0 : i32
    %11 = arith.cmpi ne, %10, %c0_i32_5 : i32
    scf.if %11 {
      %c0_8 = arith.constant 0 : index
      %c128 = arith.constant 128 : index
      %15 = vector.load %arg6[%c0_8, %c128] : memref<1x512xf32, #tpu.memory_space<vmem>>, vector<1x256xf32>
      %16 = arith.addf %15, %3 : vector<1x256xf32>
      %c0_9 = arith.constant 0 : index
      %c128_10 = arith.constant 128 : index
      %17 = vector.load %arg6[%c0_9, %c128_10] : memref<1x512xf32, #tpu.memory_space<vmem>>, vector<1x256xf32>
      tpu.vector_store %arg6[%c0_9, %c128_10], %16 {strides = array<i32>} : memref<1x512xf32, #tpu.memory_space<vmem>>, vector<1x256xf32>,
      %c0_11 = arith.constant 0 : index
      %c128_12 = arith.constant 128 : index
      %18 = vector.load %arg7[%c0_11, %c128_12] : memref<1x512xf32, #tpu.memory_space<vmem>>, vector<1x256xf32>
      %19 = arith.maximumf %18, %5 : vector<1x256xf32>
      %c0_13 = arith.constant 0 : index
      %c128_14 = arith.constant 128 : index
      %20 = vector.load %arg7[%c0_13, %c128_14] : memref<1x512xf32, #tpu.memory_space<vmem>>, vector<1x256xf32>
      tpu.vector_store %arg7[%c0_13, %c128_14], %19 {strides = array<i32>} : memref<1x512xf32, #tpu.memory_space<vmem>>, vector<1x256xf32>,
    } else {
    }
    %c0_i32_6 = arith.constant 0 : i32
    %12 = arith.cmpi eq, %arg1, %c0_i32_6 : i32
    %13 = arith.extui %12 : i1 to i32
    %c0_i32_7 = arith.constant 0 : i32
    %14 = arith.cmpi ne, %13, %c0_i32_7 : i32
    scf.if %14 {
      %c0_8 = arith.constant 0 : index
      %c0_9 = arith.constant 0 : index
      %15 = vector.load %arg3[%c0_8, %c0_9] : memref<1x256xi32, #tpu.memory_space<vmem>>, vector<1x256xi32>
      %cst_10 = arith.constant 0.000000e+00 : f32
      %16 = vector.broadcast %cst_10 : f32 to vector<1x256xf32>
      %cst_11 = arith.constant 0.000000e+00 : f32
      %17 = vector.broadcast %cst_11 : f32 to vector<1x256xf32>
      %cst_12 = arith.constant 0.000000e+00 : f32
      %18 = vector.broadcast %cst_12 : f32 to vector<1x256xf32>
      %c0_13 = arith.constant 0 : index
      %19 = memref.load %arg2[%c0_13] : memref<98xf32, #tpu.memory_space<smem>>
      %c0_14 = arith.constant 0 : index
      %c77 = arith.constant 77 : index
      %20 = vector.load %arg6[%c0_14, %c77] : memref<1x512xf32, #tpu.memory_space<vmem>>, vector<1x256xf32>
      %21 = vector.broadcast %19 : f32 to vector<1x256xf32>
      %22 = arith.mulf %21, %20 : vector<1x256xf32>
      %23 = arith.addf %17, %22 : vector<1x256xf32>
      %c49 = arith.constant 49 : index
      %24 = memref.load %arg2[%c49] : memref<98xf32, #tpu.memory_space<smem>>
      %c0_15 = arith.constant 0 : index
      %c77_16 = arith.constant 77 : index
      %25 = vector.load %arg7[%c0_15, %c77_16] : memref<1x512xf32, #tpu.memory_space<vmem>>, vector<1x256xf32>
      %26 = vector.broadcast %24 : f32 to vector<1x256xf32>
      %27 = arith.mulf %26, %25 : vector<1x256xf32>
      %28 = arith.addf %18, %27 : vector<1x256xf32>
      %c7 = arith.constant 7 : index
      %29 = memref.load %arg2[%c7] : memref<98xf32, #tpu.memory_space<smem>>
      %c0_17 = arith.constant 0 : index
      %c93 = arith.constant 93 : index
      %30 = vector.load %arg6[%c0_17, %c93] : memref<1x512xf32, #tpu.memory_space<vmem>>, vector<1x256xf32>
      %31 = vector.broadcast %29 : f32 to vector<1x256xf32>
      %32 = arith.mulf %31, %30 : vector<1x256xf32>
      %33 = arith.addf %23, %32 : vector<1x256xf32>
      %c56 = arith.constant 56 : index
      %34 = memref.load %arg2[%c56] : memref<98xf32, #tpu.memory_space<smem>>
      %c0_18 = arith.constant 0 : index
      %c93_19 = arith.constant 93 : index
      %35 = vector.load %arg7[%c0_18, %c93_19] : memref<1x512xf32, #tpu.memory_space<vmem>>, vector<1x256xf32>
      %36 = vector.broadcast %34 : f32 to vector<1x256xf32>
      %37 = arith.mulf %36, %35 : vector<1x256xf32>
      %38 = arith.addf %28, %37 : vector<1x256xf32>
      %c14 = arith.constant 14 : index
      %39 = memref.load %arg2[%c14] : memref<98xf32, #tpu.memory_space<smem>>
      %c0_20 = arith.constant 0 : index
      %c109 = arith.constant 109 : index
      %40 = vector.load %arg6[%c0_20, %c109] : memref<1x512xf32, #tpu.memory_space<vmem>>, vector<1x256xf32>
      %41 = vector.broadcast %39 : f32 to vector<1x256xf32>
      %42 = arith.mulf %41, %40 : vector<1x256xf32>
      %43 = arith.addf %33, %42 : vector<1x256xf32>
      %c63 = arith.constant 63 : index
      %44 = memref.load %arg2[%c63] : memref<98xf32, #tpu.memory_space<smem>>
      %c0_21 = arith.constant 0 : index
      %c109_22 = arith.constant 109 : index
      %45 = vector.load %arg7[%c0_21, %c109_22] : memref<1x512xf32, #tpu.memory_space<vmem>>, vector<1x256xf32>
      %46 = vector.broadcast %44 : f32 to vector<1x256xf32>
      %47 = arith.mulf %46, %45 : vector<1x256xf32>
      %48 = arith.addf %38, %47 : vector<1x256xf32>
      %c21 = arith.constant 21 : index
      %49 = memref.load %arg2[%c21] : memref<98xf32, #tpu.memory_space<smem>>
      %c0_23 = arith.constant 0 : index
      %c125 = arith.constant 125 : index
      %50 = vector.load %arg6[%c0_23, %c125] : memref<1x512xf32, #tpu.memory_space<vmem>>, vector<1x256xf32>
      %51 = vector.broadcast %49 : f32 to vector<1x256xf32>
      %52 = arith.mulf %51, %50 : vector<1x256xf32>
      %53 = arith.addf %43, %52 : vector<1x256xf32>
      %c70 = arith.constant 70 : index
      %54 = memref.load %arg2[%c70] : memref<98xf32, #tpu.memory_space<smem>>
      %c0_24 = arith.constant 0 : index
      %c125_25 = arith.constant 125 : index
      %55 = vector.load %arg7[%c0_24, %c125_25] : memref<1x512xf32, #tpu.memory_space<vmem>>, vector<1x256xf32>
      %56 = vector.broadcast %54 : f32 to vector<1x256xf32>
      %57 = arith.mulf %56, %55 : vector<1x256xf32>
      %58 = arith.addf %48, %57 : vector<1x256xf32>
      %c28 = arith.constant 28 : index
      %59 = memref.load %arg2[%c28] : memref<98xf32, #tpu.memory_space<smem>>
      %c0_26 = arith.constant 0 : index
      %c141 = arith.constant 141 : index
      %60 = vector.load %arg6[%c0_26, %c141] : memref<1x512xf32, #tpu.memory_space<vmem>>, vector<1x256xf32>
      %61 = vector.broadcast %59 : f32 to vector<1x256xf32>
      %62 = arith.mulf %61, %60 : vector<1x256xf32>
      %63 = arith.addf %53, %62 : vector<1x256xf32>
      %c77_27 = arith.constant 77 : index
      %64 = memref.load %arg2[%c77_27] : memref<98xf32, #tpu.memory_space<smem>>
      %c0_28 = arith.constant 0 : index
      %c141_29 = arith.constant 141 : index
      %65 = vector.load %arg7[%c0_28, %c141_29] : memref<1x512xf32, #tpu.memory_space<vmem>>, vector<1x256xf32>
      %66 = vector.broadcast %64 : f32 to vector<1x256xf32>
      %67 = arith.mulf %66, %65 : vector<1x256xf32>
      %68 = arith.addf %58, %67 : vector<1x256xf32>
      %c35 = arith.constant 35 : index
      %69 = memref.load %arg2[%c35] : memref<98xf32, #tpu.memory_space<smem>>
      %c0_30 = arith.constant 0 : index
      %c157 = arith.constant 157 : index
      %70 = vector.load %arg6[%c0_30, %c157] : memref<1x512xf32, #tpu.memory_space<vmem>>, vector<1x256xf32>
      %71 = vector.broadcast %69 : f32 to vector<1x256xf32>
      %72 = arith.mulf %71, %70 : vector<1x256xf32>
      %73 = arith.addf %63, %72 : vector<1x256xf32>
      %c84 = arith.constant 84 : index
      %74 = memref.load %arg2[%c84] : memref<98xf32, #tpu.memory_space<smem>>
      %c0_31 = arith.constant 0 : index
      %c157_32 = arith.constant 157 : index
      %75 = vector.load %arg7[%c0_31, %c157_32] : memref<1x512xf32, #tpu.memory_space<vmem>>, vector<1x256xf32>
      %76 = vector.broadcast %74 : f32 to vector<1x256xf32>
      %77 = arith.mulf %76, %75 : vector<1x256xf32>
      %78 = arith.addf %68, %77 : vector<1x256xf32>
      %c42 = arith.constant 42 : index
      %79 = memref.load %arg2[%c42] : memref<98xf32, #tpu.memory_space<smem>>
      %c0_33 = arith.constant 0 : index
      %c173 = arith.constant 173 : index
      %80 = vector.load %arg6[%c0_33, %c173] : memref<1x512xf32, #tpu.memory_space<vmem>>, vector<1x256xf32>
      %81 = vector.broadcast %79 : f32 to vector<1x256xf32>
      %82 = arith.mulf %81, %80 : vector<1x256xf32>
      %83 = arith.addf %73, %82 : vector<1x256xf32>
      %c91 = arith.constant 91 : index
      %84 = memref.load %arg2[%c91] : memref<98xf32, #tpu.memory_space<smem>>
      %c0_34 = arith.constant 0 : index
      %c173_35 = arith.constant 173 : index
      %85 = vector.load %arg7[%c0_34, %c173_35] : memref<1x512xf32, #tpu.memory_space<vmem>>, vector<1x256xf32>
      %86 = vector.broadcast %84 : f32 to vector<1x256xf32>
      %87 = arith.mulf %86, %85 : vector<1x256xf32>
      %88 = arith.addf %78, %87 : vector<1x256xf32>
      %89 = arith.addf %83, %88 : vector<1x256xf32>
      %c3_i32 = arith.constant 3 : i32
      %90 = vector.broadcast %c3_i32 : i32 to vector<1x256xi32>
      %91 = arith.cmpi sge, %15, %90 : vector<1x256xi32>
      %cst_36 = arith.constant 0.000000e+00 : f32
      %92 = vector.broadcast %cst_36 : f32 to vector<1x256xf32>
      %93 = arith.select %91, %89, %92 : vector<1x256xi1>, vector<1x256xf32>
      %94 = arith.addf %16, %93 : vector<1x256xf32>
      %cst_37 = arith.constant 0.000000e+00 : f32
      %95 = vector.broadcast %cst_37 : f32 to vector<1x256xf32>
      %cst_38 = arith.constant 0.000000e+00 : f32
      %96 = vector.broadcast %cst_38 : f32 to vector<1x256xf32>
      %c1 = arith.constant 1 : index
      %97 = memref.load %arg2[%c1] : memref<98xf32, #tpu.memory_space<smem>>
      %c0_39 = arith.constant 0 : index
      %c78 = arith.constant 78 : index
      %98 = vector.load %arg6[%c0_39, %c78] : memref<1x512xf32, #tpu.memory_space<vmem>>, vector<1x256xf32>
      %99 = vector.broadcast %97 : f32 to vector<1x256xf32>
      %100 = arith.mulf %99, %98 : vector<1x256xf32>
      %101 = arith.addf %95, %100 : vector<1x256xf32>
      %c50 = arith.constant 50 : index
      %102 = memref.load %arg2[%c50] : memref<98xf32, #tpu.memory_space<smem>>
      %c0_40 = arith.constant 0 : index
      %c78_41 = arith.constant 78 : index
      %103 = vector.load %arg7[%c0_40, %c78_41] : memref<1x512xf32, #tpu.memory_space<vmem>>, vector<1x256xf32>
      %104 = vector.broadcast %102 : f32 to vector<1x256xf32>
      %105 = arith.mulf %104, %103 : vector<1x256xf32>
      %106 = arith.addf %96, %105 : vector<1x256xf32>
      %c8 = arith.constant 8 : index
      %107 = memref.load %arg2[%c8] : memref<98xf32, #tpu.memory_space<smem>>
      %c0_42 = arith.constant 0 : index
      %c94 = arith.constant 94 : index
      %108 = vector.load %arg6[%c0_42, %c94] : memref<1x512xf32, #tpu.memory_space<vmem>>, vector<1x256xf32>
      %109 = vector.broadcast %107 : f32 to vector<1x256xf32>
      %110 = arith.mulf %109, %108 : vector<1x256xf32>
      %111 = arith.addf %101, %110 : vector<1x256xf32>
      %c57 = arith.constant 57 : index
      %112 = memref.load %arg2[%c57] : memref<98xf32, #tpu.memory_space<smem>>
      %c0_43 = arith.constant 0 : index
      %c94_44 = arith.constant 94 : index
      %113 = vector.load %arg7[%c0_43, %c94_44] : memref<1x512xf32, #tpu.memory_space<vmem>>, vector<1x256xf32>
      %114 = vector.broadcast %112 : f32 to vector<1x256xf32>
      %115 = arith.mulf %114, %113 : vector<1x256xf32>
      %116 = arith.addf %106, %115 : vector<1x256xf32>
      %c15 = arith.constant 15 : index
      %117 = memref.load %arg2[%c15] : memref<98xf32, #tpu.memory_space<smem>>
      %c0_45 = arith.constant 0 : index
      %c110 = arith.constant 110 : index
      %118 = vector.load %arg6[%c0_45, %c110] : memref<1x512xf32, #tpu.memory_space<vmem>>, vector<1x256xf32>
      %119 = vector.broadcast %117 : f32 to vector<1x256xf32>
      %120 = arith.mulf %119, %118 : vector<1x256xf32>
      %121 = arith.addf %111, %120 : vector<1x256xf32>
      %c64 = arith.constant 64 : index
      %122 = memref.load %arg2[%c64] : memref<98xf32, #tpu.memory_space<smem>>
      %c0_46 = arith.constant 0 : index
      %c110_47 = arith.constant 110 : index
      %123 = vector.load %arg7[%c0_46, %c110_47] : memref<1x512xf32, #tpu.memory_space<vmem>>, vector<1x256xf32>
      %124 = vector.broadcast %122 : f32 to vector<1x256xf32>
      %125 = arith.mulf %124, %123 : vector<1x256xf32>
      %126 = arith.addf %116, %125 : vector<1x256xf32>
      %c22 = arith.constant 22 : index
      %127 = memref.load %arg2[%c22] : memref<98xf32, #tpu.memory_space<smem>>
      %c0_48 = arith.constant 0 : index
      %c126 = arith.constant 126 : index
      %128 = vector.load %arg6[%c0_48, %c126] : memref<1x512xf32, #tpu.memory_space<vmem>>, vector<1x256xf32>
      %129 = vector.broadcast %127 : f32 to vector<1x256xf32>
      %130 = arith.mulf %129, %128 : vector<1x256xf32>
      %131 = arith.addf %121, %130 : vector<1x256xf32>
      %c71 = arith.constant 71 : index
      %132 = memref.load %arg2[%c71] : memref<98xf32, #tpu.memory_space<smem>>
      %c0_49 = arith.constant 0 : index
      %c126_50 = arith.constant 126 : index
      %133 = vector.load %arg7[%c0_49, %c126_50] : memref<1x512xf32, #tpu.memory_space<vmem>>, vector<1x256xf32>
      %134 = vector.broadcast %132 : f32 to vector<1x256xf32>
      %135 = arith.mulf %134, %133 : vector<1x256xf32>
      %136 = arith.addf %126, %135 : vector<1x256xf32>
      %c29 = arith.constant 29 : index
      %137 = memref.load %arg2[%c29] : memref<98xf32, #tpu.memory_space<smem>>
      %c0_51 = arith.constant 0 : index
      %c142 = arith.constant 142 : index
      %138 = vector.load %arg6[%c0_51, %c142] : memref<1x512xf32, #tpu.memory_space<vmem>>, vector<1x256xf32>
      %139 = vector.broadcast %137 : f32 to vector<1x256xf32>
      %140 = arith.mulf %139, %138 : vector<1x256xf32>
      %141 = arith.addf %131, %140 : vector<1x256xf32>
      %c78_52 = arith.constant 78 : index
      %142 = memref.load %arg2[%c78_52] : memref<98xf32, #tpu.memory_space<smem>>
      %c0_53 = arith.constant 0 : index
      %c142_54 = arith.constant 142 : index
      %143 = vector.load %arg7[%c0_53, %c142_54] : memref<1x512xf32, #tpu.memory_space<vmem>>, vector<1x256xf32>
      %144 = vector.broadcast %142 : f32 to vector<1x256xf32>
      %145 = arith.mulf %144, %143 : vector<1x256xf32>
      %146 = arith.addf %136, %145 : vector<1x256xf32>
      %c36 = arith.constant 36 : index
      %147 = memref.load %arg2[%c36] : memref<98xf32, #tpu.memory_space<smem>>
      %c0_55 = arith.constant 0 : index
      %c158 = arith.constant 158 : index
      %148 = vector.load %arg6[%c0_55, %c158] : memref<1x512xf32, #tpu.memory_space<vmem>>, vector<1x256xf32>
      %149 = vector.broadcast %147 : f32 to vector<1x256xf32>
      %150 = arith.mulf %149, %148 : vector<1x256xf32>
      %151 = arith.addf %141, %150 : vector<1x256xf32>
      %c85 = arith.constant 85 : index
      %152 = memref.load %arg2[%c85] : memref<98xf32, #tpu.memory_space<smem>>
      %c0_56 = arith.constant 0 : index
      %c158_57 = arith.constant 158 : index
      %153 = vector.load %arg7[%c0_56, %c158_57] : memref<1x512xf32, #tpu.memory_space<vmem>>, vector<1x256xf32>
      %154 = vector.broadcast %152 : f32 to vector<1x256xf32>
      %155 = arith.mulf %154, %153 : vector<1x256xf32>
      %156 = arith.addf %146, %155 : vector<1x256xf32>
      %c43 = arith.constant 43 : index
      %157 = memref.load %arg2[%c43] : memref<98xf32, #tpu.memory_space<smem>>
      %c0_58 = arith.constant 0 : index
      %c174 = arith.constant 174 : index
      %158 = vector.load %arg6[%c0_58, %c174] : memref<1x512xf32, #tpu.memory_space<vmem>>, vector<1x256xf32>
      %159 = vector.broadcast %157 : f32 to vector<1x256xf32>
      %160 = arith.mulf %159, %158 : vector<1x256xf32>
      %161 = arith.addf %151, %160 : vector<1x256xf32>
      %c92 = arith.constant 92 : index
      %162 = memref.load %arg2[%c92] : memref<98xf32, #tpu.memory_space<smem>>
      %c0_59 = arith.constant 0 : index
      %c174_60 = arith.constant 174 : index
      %163 = vector.load %arg7[%c0_59, %c174_60] : memref<1x512xf32, #tpu.memory_space<vmem>>, vector<1x256xf32>
      %164 = vector.broadcast %162 : f32 to vector<1x256xf32>
      %165 = arith.mulf %164, %163 : vector<1x256xf32>
      %166 = arith.addf %156, %165 : vector<1x256xf32>
      %167 = arith.addf %161, %166 : vector<1x256xf32>
      %c2_i32 = arith.constant 2 : i32
      %168 = vector.broadcast %c2_i32 : i32 to vector<1x256xi32>
      %169 = arith.cmpi sge, %15, %168 : vector<1x256xi32>
      %cst_61 = arith.constant 0.000000e+00 : f32
      %170 = vector.broadcast %cst_61 : f32 to vector<1x256xf32>
      %171 = arith.select %169, %167, %170 : vector<1x256xi1>, vector<1x256xf32>
      %172 = arith.addf %94, %171 : vector<1x256xf32>
      %cst_62 = arith.constant 0.000000e+00 : f32
      %173 = vector.broadcast %cst_62 : f32 to vector<1x256xf32>
      %cst_63 = arith.constant 0.000000e+00 : f32
      %174 = vector.broadcast %cst_63 : f32 to vector<1x256xf32>
      %c2 = arith.constant 2 : index
      %175 = memref.load %arg2[%c2] : memref<98xf32, #tpu.memory_space<smem>>
      %c0_64 = arith.constant 0 : index
      %c79 = arith.constant 79 : index
      %176 = vector.load %arg6[%c0_64, %c79] : memref<1x512xf32, #tpu.memory_space<vmem>>, vector<1x256xf32>
      %177 = vector.broadcast %175 : f32 to vector<1x256xf32>
      %178 = arith.mulf %177, %176 : vector<1x256xf32>
      %179 = arith.addf %173, %178 : vector<1x256xf32>
      %c51 = arith.constant 51 : index
      %180 = memref.load %arg2[%c51] : memref<98xf32, #tpu.memory_space<smem>>
      %c0_65 = arith.constant 0 : index
      %c79_66 = arith.constant 79 : index
      %181 = vector.load %arg7[%c0_65, %c79_66] : memref<1x512xf32, #tpu.memory_space<vmem>>, vector<1x256xf32>
      %182 = vector.broadcast %180 : f32 to vector<1x256xf32>
      %183 = arith.mulf %182, %181 : vector<1x256xf32>
      %184 = arith.addf %174, %183 : vector<1x256xf32>
      %c9 = arith.constant 9 : index
      %185 = memref.load %arg2[%c9] : memref<98xf32, #tpu.memory_space<smem>>
      %c0_67 = arith.constant 0 : index
      %c95 = arith.constant 95 : index
      %186 = vector.load %arg6[%c0_67, %c95] : memref<1x512xf32, #tpu.memory_space<vmem>>, vector<1x256xf32>
      %187 = vector.broadcast %185 : f32 to vector<1x256xf32>
      %188 = arith.mulf %187, %186 : vector<1x256xf32>
      %189 = arith.addf %179, %188 : vector<1x256xf32>
      %c58 = arith.constant 58 : index
      %190 = memref.load %arg2[%c58] : memref<98xf32, #tpu.memory_space<smem>>
      %c0_68 = arith.constant 0 : index
      %c95_69 = arith.constant 95 : index
      %191 = vector.load %arg7[%c0_68, %c95_69] : memref<1x512xf32, #tpu.memory_space<vmem>>, vector<1x256xf32>
      %192 = vector.broadcast %190 : f32 to vector<1x256xf32>
      %193 = arith.mulf %192, %191 : vector<1x256xf32>
      %194 = arith.addf %184, %193 : vector<1x256xf32>
      %c16 = arith.constant 16 : index
      %195 = memref.load %arg2[%c16] : memref<98xf32, #tpu.memory_space<smem>>
      %c0_70 = arith.constant 0 : index
      %c111 = arith.constant 111 : index
      %196 = vector.load %arg6[%c0_70, %c111] : memref<1x512xf32, #tpu.memory_space<vmem>>, vector<1x256xf32>
      %197 = vector.broadcast %195 : f32 to vector<1x256xf32>
      %198 = arith.mulf %197, %196 : vector<1x256xf32>
      %199 = arith.addf %189, %198 : vector<1x256xf32>
      %c65 = arith.constant 65 : index
      %200 = memref.load %arg2[%c65] : memref<98xf32, #tpu.memory_space<smem>>
      %c0_71 = arith.constant 0 : index
      %c111_72 = arith.constant 111 : index
      %201 = vector.load %arg7[%c0_71, %c111_72] : memref<1x512xf32, #tpu.memory_space<vmem>>, vector<1x256xf32>
      %202 = vector.broadcast %200 : f32 to vector<1x256xf32>
      %203 = arith.mulf %202, %201 : vector<1x256xf32>
      %204 = arith.addf %194, %203 : vector<1x256xf32>
      %c23 = arith.constant 23 : index
      %205 = memref.load %arg2[%c23] : memref<98xf32, #tpu.memory_space<smem>>
      %c0_73 = arith.constant 0 : index
      %c127 = arith.constant 127 : index
      %206 = vector.load %arg6[%c0_73, %c127] : memref<1x512xf32, #tpu.memory_space<vmem>>, vector<1x256xf32>
      %207 = vector.broadcast %205 : f32 to vector<1x256xf32>
      %208 = arith.mulf %207, %206 : vector<1x256xf32>
      %209 = arith.addf %199, %208 : vector<1x256xf32>
      %c72 = arith.constant 72 : index
      %210 = memref.load %arg2[%c72] : memref<98xf32, #tpu.memory_space<smem>>
      %c0_74 = arith.constant 0 : index
      %c127_75 = arith.constant 127 : index
      %211 = vector.load %arg7[%c0_74, %c127_75] : memref<1x512xf32, #tpu.memory_space<vmem>>, vector<1x256xf32>
      %212 = vector.broadcast %210 : f32 to vector<1x256xf32>
      %213 = arith.mulf %212, %211 : vector<1x256xf32>
      %214 = arith.addf %204, %213 : vector<1x256xf32>
      %c30 = arith.constant 30 : index
      %215 = memref.load %arg2[%c30] : memref<98xf32, #tpu.memory_space<smem>>
      %c0_76 = arith.constant 0 : index
      %c143 = arith.constant 143 : index
      %216 = vector.load %arg6[%c0_76, %c143] : memref<1x512xf32, #tpu.memory_space<vmem>>, vector<1x256xf32>
      %217 = vector.broadcast %215 : f32 to vector<1x256xf32>
      %218 = arith.mulf %217, %216 : vector<1x256xf32>
      %219 = arith.addf %209, %218 : vector<1x256xf32>
      %c79_77 = arith.constant 79 : index
      %220 = memref.load %arg2[%c79_77] : memref<98xf32, #tpu.memory_space<smem>>
      %c0_78 = arith.constant 0 : index
      %c143_79 = arith.constant 143 : index
      %221 = vector.load %arg7[%c0_78, %c143_79] : memref<1x512xf32, #tpu.memory_space<vmem>>, vector<1x256xf32>
      %222 = vector.broadcast %220 : f32 to vector<1x256xf32>
      %223 = arith.mulf %222, %221 : vector<1x256xf32>
      %224 = arith.addf %214, %223 : vector<1x256xf32>
      %c37 = arith.constant 37 : index
      %225 = memref.load %arg2[%c37] : memref<98xf32, #tpu.memory_space<smem>>
      %c0_80 = arith.constant 0 : index
      %c159 = arith.constant 159 : index
      %226 = vector.load %arg6[%c0_80, %c159] : memref<1x512xf32, #tpu.memory_space<vmem>>, vector<1x256xf32>
      %227 = vector.broadcast %225 : f32 to vector<1x256xf32>
      %228 = arith.mulf %227, %226 : vector<1x256xf32>
      %229 = arith.addf %219, %228 : vector<1x256xf32>
      %c86 = arith.constant 86 : index
      %230 = memref.load %arg2[%c86] : memref<98xf32, #tpu.memory_space<smem>>
      %c0_81 = arith.constant 0 : index
      %c159_82 = arith.constant 159 : index
      %231 = vector.load %arg7[%c0_81, %c159_82] : memref<1x512xf32, #tpu.memory_space<vmem>>, vector<1x256xf32>
      %232 = vector.broadcast %230 : f32 to vector<1x256xf32>
      %233 = arith.mulf %232, %231 : vector<1x256xf32>
      %234 = arith.addf %224, %233 : vector<1x256xf32>
      %c44 = arith.constant 44 : index
      %235 = memref.load %arg2[%c44] : memref<98xf32, #tpu.memory_space<smem>>
      %c0_83 = arith.constant 0 : index
      %c175 = arith.constant 175 : index
      %236 = vector.load %arg6[%c0_83, %c175] : memref<1x512xf32, #tpu.memory_space<vmem>>, vector<1x256xf32>
      %237 = vector.broadcast %235 : f32 to vector<1x256xf32>
      %238 = arith.mulf %237, %236 : vector<1x256xf32>
      %239 = arith.addf %229, %238 : vector<1x256xf32>
      %c93_84 = arith.constant 93 : index
      %240 = memref.load %arg2[%c93_84] : memref<98xf32, #tpu.memory_space<smem>>
      %c0_85 = arith.constant 0 : index
      %c175_86 = arith.constant 175 : index
      %241 = vector.load %arg7[%c0_85, %c175_86] : memref<1x512xf32, #tpu.memory_space<vmem>>, vector<1x256xf32>
      %242 = vector.broadcast %240 : f32 to vector<1x256xf32>
      %243 = arith.mulf %242, %241 : vector<1x256xf32>
      %244 = arith.addf %234, %243 : vector<1x256xf32>
      %245 = arith.addf %239, %244 : vector<1x256xf32>
      %c1_i32 = arith.constant 1 : i32
      %246 = vector.broadcast %c1_i32 : i32 to vector<1x256xi32>
      %247 = arith.cmpi sge, %15, %246 : vector<1x256xi32>
      %cst_87 = arith.constant 0.000000e+00 : f32
      %248 = vector.broadcast %cst_87 : f32 to vector<1x256xf32>
      %249 = arith.select %247, %245, %248 : vector<1x256xi1>, vector<1x256xf32>
      %250 = arith.addf %172, %249 : vector<1x256xf32>
      %cst_88 = arith.constant 0.000000e+00 : f32
      %251 = vector.broadcast %cst_88 : f32 to vector<1x256xf32>
      %cst_89 = arith.constant 0.000000e+00 : f32
      %252 = vector.broadcast %cst_89 : f32 to vector<1x256xf32>
      %c3 = arith.constant 3 : index
      %253 = memref.load %arg2[%c3] : memref<98xf32, #tpu.memory_space<smem>>
      %c0_90 = arith.constant 0 : index
      %c80 = arith.constant 80 : index
      %254 = vector.load %arg6[%c0_90, %c80] : memref<1x512xf32, #tpu.memory_space<vmem>>, vector<1x256xf32>
      %255 = vector.broadcast %253 : f32 to vector<1x256xf32>
      %256 = arith.mulf %255, %254 : vector<1x256xf32>
      %257 = arith.addf %251, %256 : vector<1x256xf32>
      %c52 = arith.constant 52 : index
      %258 = memref.load %arg2[%c52] : memref<98xf32, #tpu.memory_space<smem>>
      %c0_91 = arith.constant 0 : index
      %c80_92 = arith.constant 80 : index
      %259 = vector.load %arg7[%c0_91, %c80_92] : memref<1x512xf32, #tpu.memory_space<vmem>>, vector<1x256xf32>
      %260 = vector.broadcast %258 : f32 to vector<1x256xf32>
      %261 = arith.mulf %260, %259 : vector<1x256xf32>
      %262 = arith.addf %252, %261 : vector<1x256xf32>
      %c10 = arith.constant 10 : index
      %263 = memref.load %arg2[%c10] : memref<98xf32, #tpu.memory_space<smem>>
      %c0_93 = arith.constant 0 : index
      %c96 = arith.constant 96 : index
      %264 = vector.load %arg6[%c0_93, %c96] : memref<1x512xf32, #tpu.memory_space<vmem>>, vector<1x256xf32>
      %265 = vector.broadcast %263 : f32 to vector<1x256xf32>
      %266 = arith.mulf %265, %264 : vector<1x256xf32>
      %267 = arith.addf %257, %266 : vector<1x256xf32>
      %c59 = arith.constant 59 : index
      %268 = memref.load %arg2[%c59] : memref<98xf32, #tpu.memory_space<smem>>
      %c0_94 = arith.constant 0 : index
      %c96_95 = arith.constant 96 : index
      %269 = vector.load %arg7[%c0_94, %c96_95] : memref<1x512xf32, #tpu.memory_space<vmem>>, vector<1x256xf32>
      %270 = vector.broadcast %268 : f32 to vector<1x256xf32>
      %271 = arith.mulf %270, %269 : vector<1x256xf32>
      %272 = arith.addf %262, %271 : vector<1x256xf32>
      %c17 = arith.constant 17 : index
      %273 = memref.load %arg2[%c17] : memref<98xf32, #tpu.memory_space<smem>>
      %c0_96 = arith.constant 0 : index
      %c112 = arith.constant 112 : index
      %274 = vector.load %arg6[%c0_96, %c112] : memref<1x512xf32, #tpu.memory_space<vmem>>, vector<1x256xf32>
      %275 = vector.broadcast %273 : f32 to vector<1x256xf32>
      %276 = arith.mulf %275, %274 : vector<1x256xf32>
      %277 = arith.addf %267, %276 : vector<1x256xf32>
      %c66 = arith.constant 66 : index
      %278 = memref.load %arg2[%c66] : memref<98xf32, #tpu.memory_space<smem>>
      %c0_97 = arith.constant 0 : index
      %c112_98 = arith.constant 112 : index
      %279 = vector.load %arg7[%c0_97, %c112_98] : memref<1x512xf32, #tpu.memory_space<vmem>>, vector<1x256xf32>
      %280 = vector.broadcast %278 : f32 to vector<1x256xf32>
      %281 = arith.mulf %280, %279 : vector<1x256xf32>
      %282 = arith.addf %272, %281 : vector<1x256xf32>
      %c24 = arith.constant 24 : index
      %283 = memref.load %arg2[%c24] : memref<98xf32, #tpu.memory_space<smem>>
      %c0_99 = arith.constant 0 : index
      %c128 = arith.constant 128 : index
      %284 = vector.load %arg6[%c0_99, %c128] : memref<1x512xf32, #tpu.memory_space<vmem>>, vector<1x256xf32>
      %285 = vector.broadcast %283 : f32 to vector<1x256xf32>
      %286 = arith.mulf %285, %284 : vector<1x256xf32>
      %287 = arith.addf %277, %286 : vector<1x256xf32>
      %c73 = arith.constant 73 : index
      %288 = memref.load %arg2[%c73] : memref<98xf32, #tpu.memory_space<smem>>
      %c0_100 = arith.constant 0 : index
      %c128_101 = arith.constant 128 : index
      %289 = vector.load %arg7[%c0_100, %c128_101] : memref<1x512xf32, #tpu.memory_space<vmem>>, vector<1x256xf32>
      %290 = vector.broadcast %288 : f32 to vector<1x256xf32>
      %291 = arith.mulf %290, %289 : vector<1x256xf32>
      %292 = arith.addf %282, %291 : vector<1x256xf32>
      %c31 = arith.constant 31 : index
      %293 = memref.load %arg2[%c31] : memref<98xf32, #tpu.memory_space<smem>>
      %c0_102 = arith.constant 0 : index
      %c144 = arith.constant 144 : index
      %294 = vector.load %arg6[%c0_102, %c144] : memref<1x512xf32, #tpu.memory_space<vmem>>, vector<1x256xf32>
      %295 = vector.broadcast %293 : f32 to vector<1x256xf32>
      %296 = arith.mulf %295, %294 : vector<1x256xf32>
      %297 = arith.addf %287, %296 : vector<1x256xf32>
      %c80_103 = arith.constant 80 : index
      %298 = memref.load %arg2[%c80_103] : memref<98xf32, #tpu.memory_space<smem>>
      %c0_104 = arith.constant 0 : index
      %c144_105 = arith.constant 144 : index
      %299 = vector.load %arg7[%c0_104, %c144_105] : memref<1x512xf32, #tpu.memory_space<vmem>>, vector<1x256xf32>
      %300 = vector.broadcast %298 : f32 to vector<1x256xf32>
      %301 = arith.mulf %300, %299 : vector<1x256xf32>
      %302 = arith.addf %292, %301 : vector<1x256xf32>
      %c38 = arith.constant 38 : index
      %303 = memref.load %arg2[%c38] : memref<98xf32, #tpu.memory_space<smem>>
      %c0_106 = arith.constant 0 : index
      %c160 = arith.constant 160 : index
      %304 = vector.load %arg6[%c0_106, %c160] : memref<1x512xf32, #tpu.memory_space<vmem>>, vector<1x256xf32>
      %305 = vector.broadcast %303 : f32 to vector<1x256xf32>
      %306 = arith.mulf %305, %304 : vector<1x256xf32>
      %307 = arith.addf %297, %306 : vector<1x256xf32>
      %c87 = arith.constant 87 : index
      %308 = memref.load %arg2[%c87] : memref<98xf32, #tpu.memory_space<smem>>
      %c0_107 = arith.constant 0 : index
      %c160_108 = arith.constant 160 : index
      %309 = vector.load %arg7[%c0_107, %c160_108] : memref<1x512xf32, #tpu.memory_space<vmem>>, vector<1x256xf32>
      %310 = vector.broadcast %308 : f32 to vector<1x256xf32>
      %311 = arith.mulf %310, %309 : vector<1x256xf32>
      %312 = arith.addf %302, %311 : vector<1x256xf32>
      %c45 = arith.constant 45 : index
      %313 = memref.load %arg2[%c45] : memref<98xf32, #tpu.memory_space<smem>>
      %c0_109 = arith.constant 0 : index
      %c176 = arith.constant 176 : index
      %314 = vector.load %arg6[%c0_109, %c176] : memref<1x512xf32, #tpu.memory_space<vmem>>, vector<1x256xf32>
      %315 = vector.broadcast %313 : f32 to vector<1x256xf32>
      %316 = arith.mulf %315, %314 : vector<1x256xf32>
      %317 = arith.addf %307, %316 : vector<1x256xf32>
      %c94_110 = arith.constant 94 : index
      %318 = memref.load %arg2[%c94_110] : memref<98xf32, #tpu.memory_space<smem>>
      %c0_111 = arith.constant 0 : index
      %c176_112 = arith.constant 176 : index
      %319 = vector.load %arg7[%c0_111, %c176_112] : memref<1x512xf32, #tpu.memory_space<vmem>>, vector<1x256xf32>
      %320 = vector.broadcast %318 : f32 to vector<1x256xf32>
      %321 = arith.mulf %320, %319 : vector<1x256xf32>
      %322 = arith.addf %312, %321 : vector<1x256xf32>
      %323 = arith.addf %317, %322 : vector<1x256xf32>
      %324 = arith.addf %250, %323 : vector<1x256xf32>
      %cst_113 = arith.constant 0.000000e+00 : f32
      %325 = vector.broadcast %cst_113 : f32 to vector<1x256xf32>
      %cst_114 = arith.constant 0.000000e+00 : f32
      %326 = vector.broadcast %cst_114 : f32 to vector<1x256xf32>
      %c4 = arith.constant 4 : index
      %327 = memref.load %arg2[%c4] : memref<98xf32, #tpu.memory_space<smem>>
      %c0_115 = arith.constant 0 : index
      %c81 = arith.constant 81 : index
      %328 = vector.load %arg6[%c0_115, %c81] : memref<1x512xf32, #tpu.memory_space<vmem>>, vector<1x256xf32>
      %329 = vector.broadcast %327 : f32 to vector<1x256xf32>
      %330 = arith.mulf %329, %328 : vector<1x256xf32>
      %331 = arith.addf %325, %330 : vector<1x256xf32>
      %c53 = arith.constant 53 : index
      %332 = memref.load %arg2[%c53] : memref<98xf32, #tpu.memory_space<smem>>
      %c0_116 = arith.constant 0 : index
      %c81_117 = arith.constant 81 : index
      %333 = vector.load %arg7[%c0_116, %c81_117] : memref<1x512xf32, #tpu.memory_space<vmem>>, vector<1x256xf32>
      %334 = vector.broadcast %332 : f32 to vector<1x256xf32>
      %335 = arith.mulf %334, %333 : vector<1x256xf32>
      %336 = arith.addf %326, %335 : vector<1x256xf32>
      %c11 = arith.constant 11 : index
      %337 = memref.load %arg2[%c11] : memref<98xf32, #tpu.memory_space<smem>>
      %c0_118 = arith.constant 0 : index
      %c97 = arith.constant 97 : index
      %338 = vector.load %arg6[%c0_118, %c97] : memref<1x512xf32, #tpu.memory_space<vmem>>, vector<1x256xf32>
      %339 = vector.broadcast %337 : f32 to vector<1x256xf32>
      %340 = arith.mulf %339, %338 : vector<1x256xf32>
      %341 = arith.addf %331, %340 : vector<1x256xf32>
      %c60 = arith.constant 60 : index
      %342 = memref.load %arg2[%c60] : memref<98xf32, #tpu.memory_space<smem>>
      %c0_119 = arith.constant 0 : index
      %c97_120 = arith.constant 97 : index
      %343 = vector.load %arg7[%c0_119, %c97_120] : memref<1x512xf32, #tpu.memory_space<vmem>>, vector<1x256xf32>
      %344 = vector.broadcast %342 : f32 to vector<1x256xf32>
      %345 = arith.mulf %344, %343 : vector<1x256xf32>
      %346 = arith.addf %336, %345 : vector<1x256xf32>
      %c18 = arith.constant 18 : index
      %347 = memref.load %arg2[%c18] : memref<98xf32, #tpu.memory_space<smem>>
      %c0_121 = arith.constant 0 : index
      %c113 = arith.constant 113 : index
      %348 = vector.load %arg6[%c0_121, %c113] : memref<1x512xf32, #tpu.memory_space<vmem>>, vector<1x256xf32>
      %349 = vector.broadcast %347 : f32 to vector<1x256xf32>
      %350 = arith.mulf %349, %348 : vector<1x256xf32>
      %351 = arith.addf %341, %350 : vector<1x256xf32>
      %c67 = arith.constant 67 : index
      %352 = memref.load %arg2[%c67] : memref<98xf32, #tpu.memory_space<smem>>
      %c0_122 = arith.constant 0 : index
      %c113_123 = arith.constant 113 : index
      %353 = vector.load %arg7[%c0_122, %c113_123] : memref<1x512xf32, #tpu.memory_space<vmem>>, vector<1x256xf32>
      %354 = vector.broadcast %352 : f32 to vector<1x256xf32>
      %355 = arith.mulf %354, %353 : vector<1x256xf32>
      %356 = arith.addf %346, %355 : vector<1x256xf32>
      %c25 = arith.constant 25 : index
      %357 = memref.load %arg2[%c25] : memref<98xf32, #tpu.memory_space<smem>>
      %c0_124 = arith.constant 0 : index
      %c129 = arith.constant 129 : index
      %358 = vector.load %arg6[%c0_124, %c129] : memref<1x512xf32, #tpu.memory_space<vmem>>, vector<1x256xf32>
      %359 = vector.broadcast %357 : f32 to vector<1x256xf32>
      %360 = arith.mulf %359, %358 : vector<1x256xf32>
      %361 = arith.addf %351, %360 : vector<1x256xf32>
      %c74 = arith.constant 74 : index
      %362 = memref.load %arg2[%c74] : memref<98xf32, #tpu.memory_space<smem>>
      %c0_125 = arith.constant 0 : index
      %c129_126 = arith.constant 129 : index
      %363 = vector.load %arg7[%c0_125, %c129_126] : memref<1x512xf32, #tpu.memory_space<vmem>>, vector<1x256xf32>
      %364 = vector.broadcast %362 : f32 to vector<1x256xf32>
      %365 = arith.mulf %364, %363 : vector<1x256xf32>
      %366 = arith.addf %356, %365 : vector<1x256xf32>
      %c32 = arith.constant 32 : index
      %367 = memref.load %arg2[%c32] : memref<98xf32, #tpu.memory_space<smem>>
      %c0_127 = arith.constant 0 : index
      %c145 = arith.constant 145 : index
      %368 = vector.load %arg6[%c0_127, %c145] : memref<1x512xf32, #tpu.memory_space<vmem>>, vector<1x256xf32>
      %369 = vector.broadcast %367 : f32 to vector<1x256xf32>
      %370 = arith.mulf %369, %368 : vector<1x256xf32>
      %371 = arith.addf %361, %370 : vector<1x256xf32>
      %c81_128 = arith.constant 81 : index
      %372 = memref.load %arg2[%c81_128] : memref<98xf32, #tpu.memory_space<smem>>
      %c0_129 = arith.constant 0 : index
      %c145_130 = arith.constant 145 : index
      %373 = vector.load %arg7[%c0_129, %c145_130] : memref<1x512xf32, #tpu.memory_space<vmem>>, vector<1x256xf32>
      %374 = vector.broadcast %372 : f32 to vector<1x256xf32>
      %375 = arith.mulf %374, %373 : vector<1x256xf32>
      %376 = arith.addf %366, %375 : vector<1x256xf32>
      %c39 = arith.constant 39 : index
      %377 = memref.load %arg2[%c39] : memref<98xf32, #tpu.memory_space<smem>>
      %c0_131 = arith.constant 0 : index
      %c161 = arith.constant 161 : index
      %378 = vector.load %arg6[%c0_131, %c161] : memref<1x512xf32, #tpu.memory_space<vmem>>, vector<1x256xf32>
      %379 = vector.broadcast %377 : f32 to vector<1x256xf32>
      %380 = arith.mulf %379, %378 : vector<1x256xf32>
      %381 = arith.addf %371, %380 : vector<1x256xf32>
      %c88 = arith.constant 88 : index
      %382 = memref.load %arg2[%c88] : memref<98xf32, #tpu.memory_space<smem>>
      %c0_132 = arith.constant 0 : index
      %c161_133 = arith.constant 161 : index
      %383 = vector.load %arg7[%c0_132, %c161_133] : memref<1x512xf32, #tpu.memory_space<vmem>>, vector<1x256xf32>
      %384 = vector.broadcast %382 : f32 to vector<1x256xf32>
      %385 = arith.mulf %384, %383 : vector<1x256xf32>
      %386 = arith.addf %376, %385 : vector<1x256xf32>
      %c46 = arith.constant 46 : index
      %387 = memref.load %arg2[%c46] : memref<98xf32, #tpu.memory_space<smem>>
      %c0_134 = arith.constant 0 : index
      %c177 = arith.constant 177 : index
      %388 = vector.load %arg6[%c0_134, %c177] : memref<1x512xf32, #tpu.memory_space<vmem>>, vector<1x256xf32>
      %389 = vector.broadcast %387 : f32 to vector<1x256xf32>
      %390 = arith.mulf %389, %388 : vector<1x256xf32>
      %391 = arith.addf %381, %390 : vector<1x256xf32>
      %c95_135 = arith.constant 95 : index
      %392 = memref.load %arg2[%c95_135] : memref<98xf32, #tpu.memory_space<smem>>
      %c0_136 = arith.constant 0 : index
      %c177_137 = arith.constant 177 : index
      %393 = vector.load %arg7[%c0_136, %c177_137] : memref<1x512xf32, #tpu.memory_space<vmem>>, vector<1x256xf32>
      %394 = vector.broadcast %392 : f32 to vector<1x256xf32>
      %395 = arith.mulf %394, %393 : vector<1x256xf32>
      %396 = arith.addf %386, %395 : vector<1x256xf32>
      %397 = arith.addf %391, %396 : vector<1x256xf32>
      %c15_i32 = arith.constant 15 : i32
      %398 = vector.broadcast %c15_i32 : i32 to vector<1x256xi32>
      %399 = arith.cmpi slt, %15, %398 : vector<1x256xi32>
      %cst_138 = arith.constant 0.000000e+00 : f32
      %400 = vector.broadcast %cst_138 : f32 to vector<1x256xf32>
      %401 = arith.select %399, %397, %400 : vector<1x256xi1>, vector<1x256xf32>
      %402 = arith.addf %324, %401 : vector<1x256xf32>
      %cst_139 = arith.constant 0.000000e+00 : f32
      %403 = vector.broadcast %cst_139 : f32 to vector<1x256xf32>
      %cst_140 = arith.constant 0.000000e+00 : f32
      %404 = vector.broadcast %cst_140 : f32 to vector<1x256xf32>
      %c5 = arith.constant 5 : index
      %405 = memref.load %arg2[%c5] : memref<98xf32, #tpu.memory_space<smem>>
      %c0_141 = arith.constant 0 : index
      %c82 = arith.constant 82 : index
      %406 = vector.load %arg6[%c0_141, %c82] : memref<1x512xf32, #tpu.memory_space<vmem>>, vector<1x256xf32>
      %407 = vector.broadcast %405 : f32 to vector<1x256xf32>
      %408 = arith.mulf %407, %406 : vector<1x256xf32>
      %409 = arith.addf %403, %408 : vector<1x256xf32>
      %c54 = arith.constant 54 : index
      %410 = memref.load %arg2[%c54] : memref<98xf32, #tpu.memory_space<smem>>
      %c0_142 = arith.constant 0 : index
      %c82_143 = arith.constant 82 : index
      %411 = vector.load %arg7[%c0_142, %c82_143] : memref<1x512xf32, #tpu.memory_space<vmem>>, vector<1x256xf32>
      %412 = vector.broadcast %410 : f32 to vector<1x256xf32>
      %413 = arith.mulf %412, %411 : vector<1x256xf32>
      %414 = arith.addf %404, %413 : vector<1x256xf32>
      %c12 = arith.constant 12 : index
      %415 = memref.load %arg2[%c12] : memref<98xf32, #tpu.memory_space<smem>>
      %c0_144 = arith.constant 0 : index
      %c98 = arith.constant 98 : index
      %416 = vector.load %arg6[%c0_144, %c98] : memref<1x512xf32, #tpu.memory_space<vmem>>, vector<1x256xf32>
      %417 = vector.broadcast %415 : f32 to vector<1x256xf32>
      %418 = arith.mulf %417, %416 : vector<1x256xf32>
      %419 = arith.addf %409, %418 : vector<1x256xf32>
      %c61 = arith.constant 61 : index
      %420 = memref.load %arg2[%c61] : memref<98xf32, #tpu.memory_space<smem>>
      %c0_145 = arith.constant 0 : index
      %c98_146 = arith.constant 98 : index
      %421 = vector.load %arg7[%c0_145, %c98_146] : memref<1x512xf32, #tpu.memory_space<vmem>>, vector<1x256xf32>
      %422 = vector.broadcast %420 : f32 to vector<1x256xf32>
      %423 = arith.mulf %422, %421 : vector<1x256xf32>
      %424 = arith.addf %414, %423 : vector<1x256xf32>
      %c19 = arith.constant 19 : index
      %425 = memref.load %arg2[%c19] : memref<98xf32, #tpu.memory_space<smem>>
      %c0_147 = arith.constant 0 : index
      %c114 = arith.constant 114 : index
      %426 = vector.load %arg6[%c0_147, %c114] : memref<1x512xf32, #tpu.memory_space<vmem>>, vector<1x256xf32>
      %427 = vector.broadcast %425 : f32 to vector<1x256xf32>
      %428 = arith.mulf %427, %426 : vector<1x256xf32>
      %429 = arith.addf %419, %428 : vector<1x256xf32>
      %c68 = arith.constant 68 : index
      %430 = memref.load %arg2[%c68] : memref<98xf32, #tpu.memory_space<smem>>
      %c0_148 = arith.constant 0 : index
      %c114_149 = arith.constant 114 : index
      %431 = vector.load %arg7[%c0_148, %c114_149] : memref<1x512xf32, #tpu.memory_space<vmem>>, vector<1x256xf32>
      %432 = vector.broadcast %430 : f32 to vector<1x256xf32>
      %433 = arith.mulf %432, %431 : vector<1x256xf32>
      %434 = arith.addf %424, %433 : vector<1x256xf32>
      %c26 = arith.constant 26 : index
      %435 = memref.load %arg2[%c26] : memref<98xf32, #tpu.memory_space<smem>>
      %c0_150 = arith.constant 0 : index
      %c130 = arith.constant 130 : index
      %436 = vector.load %arg6[%c0_150, %c130] : memref<1x512xf32, #tpu.memory_space<vmem>>, vector<1x256xf32>
      %437 = vector.broadcast %435 : f32 to vector<1x256xf32>
      %438 = arith.mulf %437, %436 : vector<1x256xf32>
      %439 = arith.addf %429, %438 : vector<1x256xf32>
      %c75 = arith.constant 75 : index
      %440 = memref.load %arg2[%c75] : memref<98xf32, #tpu.memory_space<smem>>
      %c0_151 = arith.constant 0 : index
      %c130_152 = arith.constant 130 : index
      %441 = vector.load %arg7[%c0_151, %c130_152] : memref<1x512xf32, #tpu.memory_space<vmem>>, vector<1x256xf32>
      %442 = vector.broadcast %440 : f32 to vector<1x256xf32>
      %443 = arith.mulf %442, %441 : vector<1x256xf32>
      %444 = arith.addf %434, %443 : vector<1x256xf32>
      %c33 = arith.constant 33 : index
      %445 = memref.load %arg2[%c33] : memref<98xf32, #tpu.memory_space<smem>>
      %c0_153 = arith.constant 0 : index
      %c146 = arith.constant 146 : index
      %446 = vector.load %arg6[%c0_153, %c146] : memref<1x512xf32, #tpu.memory_space<vmem>>, vector<1x256xf32>
      %447 = vector.broadcast %445 : f32 to vector<1x256xf32>
      %448 = arith.mulf %447, %446 : vector<1x256xf32>
      %449 = arith.addf %439, %448 : vector<1x256xf32>
      %c82_154 = arith.constant 82 : index
      %450 = memref.load %arg2[%c82_154] : memref<98xf32, #tpu.memory_space<smem>>
      %c0_155 = arith.constant 0 : index
      %c146_156 = arith.constant 146 : index
      %451 = vector.load %arg7[%c0_155, %c146_156] : memref<1x512xf32, #tpu.memory_space<vmem>>, vector<1x256xf32>
      %452 = vector.broadcast %450 : f32 to vector<1x256xf32>
      %453 = arith.mulf %452, %451 : vector<1x256xf32>
      %454 = arith.addf %444, %453 : vector<1x256xf32>
      %c40 = arith.constant 40 : index
      %455 = memref.load %arg2[%c40] : memref<98xf32, #tpu.memory_space<smem>>
      %c0_157 = arith.constant 0 : index
      %c162 = arith.constant 162 : index
      %456 = vector.load %arg6[%c0_157, %c162] : memref<1x512xf32, #tpu.memory_space<vmem>>, vector<1x256xf32>
      %457 = vector.broadcast %455 : f32 to vector<1x256xf32>
      %458 = arith.mulf %457, %456 : vector<1x256xf32>
      %459 = arith.addf %449, %458 : vector<1x256xf32>
      %c89 = arith.constant 89 : index
      %460 = memref.load %arg2[%c89] : memref<98xf32, #tpu.memory_space<smem>>
      %c0_158 = arith.constant 0 : index
      %c162_159 = arith.constant 162 : index
      %461 = vector.load %arg7[%c0_158, %c162_159] : memref<1x512xf32, #tpu.memory_space<vmem>>, vector<1x256xf32>
      %462 = vector.broadcast %460 : f32 to vector<1x256xf32>
      %463 = arith.mulf %462, %461 : vector<1x256xf32>
      %464 = arith.addf %454, %463 : vector<1x256xf32>
      %c47 = arith.constant 47 : index
      %465 = memref.load %arg2[%c47] : memref<98xf32, #tpu.memory_space<smem>>
      %c0_160 = arith.constant 0 : index
      %c178 = arith.constant 178 : index
      %466 = vector.load %arg6[%c0_160, %c178] : memref<1x512xf32, #tpu.memory_space<vmem>>, vector<1x256xf32>
      %467 = vector.broadcast %465 : f32 to vector<1x256xf32>
      %468 = arith.mulf %467, %466 : vector<1x256xf32>
      %469 = arith.addf %459, %468 : vector<1x256xf32>
      %c96_161 = arith.constant 96 : index
      %470 = memref.load %arg2[%c96_161] : memref<98xf32, #tpu.memory_space<smem>>
      %c0_162 = arith.constant 0 : index
      %c178_163 = arith.constant 178 : index
      %471 = vector.load %arg7[%c0_162, %c178_163] : memref<1x512xf32, #tpu.memory_space<vmem>>, vector<1x256xf32>
      %472 = vector.broadcast %470 : f32 to vector<1x256xf32>
      %473 = arith.mulf %472, %471 : vector<1x256xf32>
      %474 = arith.addf %464, %473 : vector<1x256xf32>
      %475 = arith.addf %469, %474 : vector<1x256xf32>
      %c14_i32 = arith.constant 14 : i32
      %476 = vector.broadcast %c14_i32 : i32 to vector<1x256xi32>
      %477 = arith.cmpi slt, %15, %476 : vector<1x256xi32>
      %cst_164 = arith.constant 0.000000e+00 : f32
      %478 = vector.broadcast %cst_164 : f32 to vector<1x256xf32>
      %479 = arith.select %477, %475, %478 : vector<1x256xi1>, vector<1x256xf32>
      %480 = arith.addf %402, %479 : vector<1x256xf32>
      %cst_165 = arith.constant 0.000000e+00 : f32
      %481 = vector.broadcast %cst_165 : f32 to vector<1x256xf32>
      %cst_166 = arith.constant 0.000000e+00 : f32
      %482 = vector.broadcast %cst_166 : f32 to vector<1x256xf32>
      %c6 = arith.constant 6 : index
      %483 = memref.load %arg2[%c6] : memref<98xf32, #tpu.memory_space<smem>>
      %c0_167 = arith.constant 0 : index
      %c83 = arith.constant 83 : index
      %484 = vector.load %arg6[%c0_167, %c83] : memref<1x512xf32, #tpu.memory_space<vmem>>, vector<1x256xf32>
      %485 = vector.broadcast %483 : f32 to vector<1x256xf32>
      %486 = arith.mulf %485, %484 : vector<1x256xf32>
      %487 = arith.addf %481, %486 : vector<1x256xf32>
      %c55 = arith.constant 55 : index
      %488 = memref.load %arg2[%c55] : memref<98xf32, #tpu.memory_space<smem>>
      %c0_168 = arith.constant 0 : index
      %c83_169 = arith.constant 83 : index
      %489 = vector.load %arg7[%c0_168, %c83_169] : memref<1x512xf32, #tpu.memory_space<vmem>>, vector<1x256xf32>
      %490 = vector.broadcast %488 : f32 to vector<1x256xf32>
      %491 = arith.mulf %490, %489 : vector<1x256xf32>
      %492 = arith.addf %482, %491 : vector<1x256xf32>
      %c13 = arith.constant 13 : index
      %493 = memref.load %arg2[%c13] : memref<98xf32, #tpu.memory_space<smem>>
      %c0_170 = arith.constant 0 : index
      %c99 = arith.constant 99 : index
      %494 = vector.load %arg6[%c0_170, %c99] : memref<1x512xf32, #tpu.memory_space<vmem>>, vector<1x256xf32>
      %495 = vector.broadcast %493 : f32 to vector<1x256xf32>
      %496 = arith.mulf %495, %494 : vector<1x256xf32>
      %497 = arith.addf %487, %496 : vector<1x256xf32>
      %c62 = arith.constant 62 : index
      %498 = memref.load %arg2[%c62] : memref<98xf32, #tpu.memory_space<smem>>
      %c0_171 = arith.constant 0 : index
      %c99_172 = arith.constant 99 : index
      %499 = vector.load %arg7[%c0_171, %c99_172] : memref<1x512xf32, #tpu.memory_space<vmem>>, vector<1x256xf32>
      %500 = vector.broadcast %498 : f32 to vector<1x256xf32>
      %501 = arith.mulf %500, %499 : vector<1x256xf32>
      %502 = arith.addf %492, %501 : vector<1x256xf32>
      %c20 = arith.constant 20 : index
      %503 = memref.load %arg2[%c20] : memref<98xf32, #tpu.memory_space<smem>>
      %c0_173 = arith.constant 0 : index
      %c115 = arith.constant 115 : index
      %504 = vector.load %arg6[%c0_173, %c115] : memref<1x512xf32, #tpu.memory_space<vmem>>, vector<1x256xf32>
      %505 = vector.broadcast %503 : f32 to vector<1x256xf32>
      %506 = arith.mulf %505, %504 : vector<1x256xf32>
      %507 = arith.addf %497, %506 : vector<1x256xf32>
      %c69 = arith.constant 69 : index
      %508 = memref.load %arg2[%c69] : memref<98xf32, #tpu.memory_space<smem>>
      %c0_174 = arith.constant 0 : index
      %c115_175 = arith.constant 115 : index
      %509 = vector.load %arg7[%c0_174, %c115_175] : memref<1x512xf32, #tpu.memory_space<vmem>>, vector<1x256xf32>
      %510 = vector.broadcast %508 : f32 to vector<1x256xf32>
      %511 = arith.mulf %510, %509 : vector<1x256xf32>
      %512 = arith.addf %502, %511 : vector<1x256xf32>
      %c27 = arith.constant 27 : index
      %513 = memref.load %arg2[%c27] : memref<98xf32, #tpu.memory_space<smem>>
      %c0_176 = arith.constant 0 : index
      %c131 = arith.constant 131 : index
      %514 = vector.load %arg6[%c0_176, %c131] : memref<1x512xf32, #tpu.memory_space<vmem>>, vector<1x256xf32>
      %515 = vector.broadcast %513 : f32 to vector<1x256xf32>
      %516 = arith.mulf %515, %514 : vector<1x256xf32>
      %517 = arith.addf %507, %516 : vector<1x256xf32>
      %c76 = arith.constant 76 : index
      %518 = memref.load %arg2[%c76] : memref<98xf32, #tpu.memory_space<smem>>
      %c0_177 = arith.constant 0 : index
      %c131_178 = arith.constant 131 : index
      %519 = vector.load %arg7[%c0_177, %c131_178] : memref<1x512xf32, #tpu.memory_space<vmem>>, vector<1x256xf32>
      %520 = vector.broadcast %518 : f32 to vector<1x256xf32>
      %521 = arith.mulf %520, %519 : vector<1x256xf32>
      %522 = arith.addf %512, %521 : vector<1x256xf32>
      %c34 = arith.constant 34 : index
      %523 = memref.load %arg2[%c34] : memref<98xf32, #tpu.memory_space<smem>>
      %c0_179 = arith.constant 0 : index
      %c147 = arith.constant 147 : index
      %524 = vector.load %arg6[%c0_179, %c147] : memref<1x512xf32, #tpu.memory_space<vmem>>, vector<1x256xf32>
      %525 = vector.broadcast %523 : f32 to vector<1x256xf32>
      %526 = arith.mulf %525, %524 : vector<1x256xf32>
      %527 = arith.addf %517, %526 : vector<1x256xf32>
      %c83_180 = arith.constant 83 : index
      %528 = memref.load %arg2[%c83_180] : memref<98xf32, #tpu.memory_space<smem>>
      %c0_181 = arith.constant 0 : index
      %c147_182 = arith.constant 147 : index
      %529 = vector.load %arg7[%c0_181, %c147_182] : memref<1x512xf32, #tpu.memory_space<vmem>>, vector<1x256xf32>
      %530 = vector.broadcast %528 : f32 to vector<1x256xf32>
      %531 = arith.mulf %530, %529 : vector<1x256xf32>
      %532 = arith.addf %522, %531 : vector<1x256xf32>
      %c41 = arith.constant 41 : index
      %533 = memref.load %arg2[%c41] : memref<98xf32, #tpu.memory_space<smem>>
      %c0_183 = arith.constant 0 : index
      %c163 = arith.constant 163 : index
      %534 = vector.load %arg6[%c0_183, %c163] : memref<1x512xf32, #tpu.memory_space<vmem>>, vector<1x256xf32>
      %535 = vector.broadcast %533 : f32 to vector<1x256xf32>
      %536 = arith.mulf %535, %534 : vector<1x256xf32>
      %537 = arith.addf %527, %536 : vector<1x256xf32>
      %c90 = arith.constant 90 : index
      %538 = memref.load %arg2[%c90] : memref<98xf32, #tpu.memory_space<smem>>
      %c0_184 = arith.constant 0 : index
      %c163_185 = arith.constant 163 : index
      %539 = vector.load %arg7[%c0_184, %c163_185] : memref<1x512xf32, #tpu.memory_space<vmem>>, vector<1x256xf32>
      %540 = vector.broadcast %538 : f32 to vector<1x256xf32>
      %541 = arith.mulf %540, %539 : vector<1x256xf32>
      %542 = arith.addf %532, %541 : vector<1x256xf32>
      %c48 = arith.constant 48 : index
      %543 = memref.load %arg2[%c48] : memref<98xf32, #tpu.memory_space<smem>>
      %c0_186 = arith.constant 0 : index
      %c179 = arith.constant 179 : index
      %544 = vector.load %arg6[%c0_186, %c179] : memref<1x512xf32, #tpu.memory_space<vmem>>, vector<1x256xf32>
      %545 = vector.broadcast %543 : f32 to vector<1x256xf32>
      %546 = arith.mulf %545, %544 : vector<1x256xf32>
      %547 = arith.addf %537, %546 : vector<1x256xf32>
      %c97_187 = arith.constant 97 : index
      %548 = memref.load %arg2[%c97_187] : memref<98xf32, #tpu.memory_space<smem>>
      %c0_188 = arith.constant 0 : index
      %c179_189 = arith.constant 179 : index
      %549 = vector.load %arg7[%c0_188, %c179_189] : memref<1x512xf32, #tpu.memory_space<vmem>>, vector<1x256xf32>
      %550 = vector.broadcast %548 : f32 to vector<1x256xf32>
      %551 = arith.mulf %550, %549 : vector<1x256xf32>
      %552 = arith.addf %542, %551 : vector<1x256xf32>
      %553 = arith.addf %547, %552 : vector<1x256xf32>
      %c13_i32 = arith.constant 13 : i32
      %554 = vector.broadcast %c13_i32 : i32 to vector<1x256xi32>
      %555 = arith.cmpi slt, %15, %554 : vector<1x256xi32>
      %cst_190 = arith.constant 0.000000e+00 : f32
      %556 = vector.broadcast %cst_190 : f32 to vector<1x256xf32>
      %557 = arith.select %555, %553, %556 : vector<1x256xi1>, vector<1x256xf32>
      %558 = arith.addf %480, %557 : vector<1x256xf32>
      %559 = arith.negf %558 : vector<1x256xf32>
      %560 = math.exp %559 : vector<1x256xf32>
      %cst_191 = arith.constant 1.000000e+00 : f32
      %561 = vector.broadcast %cst_191 : f32 to vector<1x256xf32>
      %562 = arith.addf %561, %560 : vector<1x256xf32>
      %563 = arith.divf %561, %562 : vector<1x256xf32>
      %c0_192 = arith.constant 0 : index
      %c0_193 = arith.constant 0 : index
      %c0_194 = arith.constant 0 : index
      %564 = vector.load %arg5[%c0_192, %c0_193, %c0_194] : memref<1x1x256xf32, #tpu.memory_space<vmem>>, vector<1x1x256xf32>
      %565 = vector.shape_cast %564 : vector<1x1x256xf32> to vector<1x256xf32>
      %566 = vector.shape_cast %563 : vector<1x256xf32> to vector<1x1x256xf32>
      tpu.vector_store %arg5[%c0_192, %c0_193, %c0_194], %566 {strides = array<i32>} : memref<1x1x256xf32, #tpu.memory_space<vmem>>, vector<1x1x256xf32>,
    } else {
    }
    return
  }
  func.func @transform_0(%arg0: i32, %arg1: i32) -> i32 {
    %c0_i32 = arith.constant 0 : i32
    %c0_i32_0 = arith.constant 0 : i32
    return %c0_i32 : i32
  }
  func.func @transform_1(%arg0: i32, %arg1: i32) -> (i32, i32) {
    %c0_i32 = arith.constant 0 : i32
    %c0_i32_0 = arith.constant 0 : i32
    %c0_i32_1 = arith.constant 0 : i32
    return %c0_i32, %c0_i32_0 : i32, i32
  }
  func.func @transform_2(%arg0: i32, %arg1: i32) -> (i32, i32, i32) {
    %c0_i32 = arith.constant 0 : i32
    %c0_i32_0 = arith.constant 0 : i32
    return %arg0, %arg1, %c0_i32 : i32, i32, i32
  }
  func.func @transform_3(%arg0: i32, %arg1: i32) -> (i32, i32, i32) {
    %c0_i32 = arith.constant 0 : i32
    %c0_i32_0 = arith.constant 0 : i32
    %c0_i32_1 = arith.constant 0 : i32
    return %arg0, %c0_i32, %c0_i32_0 : i32, i32, i32
  }
}

</mosaic_0001>

<llo_original>
// kernel: tpu_custom_call.1
$region0: #{tpu_custom_call.1}
  #allocation0 [shape = 'u32[]', space=smem, size = 0x4, offset = 0x4, fixed_abs, tag = 'smem constant byte address 0x4 - core index']
  #allocation1 [shape = 'u32[144,128]{1,0:T(1,128)}', space=vmem, size = 0x12000, scoped, tag = 'internal scratch']
  #allocation2 [shape = 'f32[1,512]{1,0:T(1,128)}', space=vmem, size = 0x800, scoped, tag = 'scratch operand']
  #allocation3 [shape = 'f32[1,512]{1,0:T(1,128)}', space=vmem, size = 0x800, scoped, tag = 'scratch operand']
  %s0 = inlined_call_operand.hbm [shape: f32[98], index: 0, kind: input, shape index: {}]
  %s1 = inlined_call_operand.vmem [shape: s32[1,256], index: 1, kind: input, shape index: {}]
  %s2 = inlined_call_operand.hbm [shape: f32[2,4,256], index: 2, kind: input, shape index: {}]
  %s3 = inlined_call_operand.hbm [shape: f32[2,1,256], index: 3, kind: output, shape index: {}]
  %s4 = sld [smem:[#allocation0]]
  $region65: #{tpu_custom_call.1} parent=0
    _
  %s6 = ssub.s32 1, %s4
  %s7 = scalar_select 0, %s6, %s4
  $region1: #{tpu_custom_call.1} parent=0
    #allocation4 [shape = 'u8[512]{0}', space=smem, size = 0x200, scoped, tag = 'input window, operand 0, single buffered']
    #allocation5 [shape = 's32[2]{0}', space=sflag, size = 0x8, scoped, tag = 'scoped memory for tpu_custom_call.1']
    #allocation6 [shape = 's32[2]{0}', space=sflag, size = 0x8, scoped, tag = 'scoped memory for tpu_custom_call.1']
    #allocation7 [shape = 's32[2]{0}', space=sflag, size = 0x8, scoped, tag = 'scoped memory for tpu_custom_call.1']
    #allocation8 [shape = 'u8[8192]{0}', space=vmem, size = 0x2000, scoped, tag = 'input window, operand 2']
    #allocation9 [shape = 'u8[2048]{0}', space=vmem, size = 0x800, scoped, tag = 'output window, operand 0']
    %8 = vsyncpa [#allocation7], 0
    %9 = vsyncpa [#allocation5], 0
    %s10 = scalar_lea.sflag [#allocation5], 1
    %11 = vsyncpa %s10, 0
    %12 = vsyncpa [#allocation6], 0
    %s13 = scalar_lea.sflag [#allocation6], 1
    %14 = vsyncpa %s13, 0
    loop: start=0, step=1, limit=4
    $region2: #{tpu_custom_call.1} parent=1 // loop_pre_header
      _
    $region3: #{tpu_custom_call.1} parent=1 // loop_header
      %s16 = sphi 0, %s20
      %p17 = scmp.ge.s32.totalorder %s16, 4
      %s23 = sphi 0, %s35
      %s24 = sphi 0, %s31
      %s25 = sphi 0, %s23
      %s26 = sphi 0, %s24
      %s27 = sphi 0, %s25
      %s28 = sphi 0, %s26
      %s36 = sphi 0, %s36
      %s38 = sphi 0, %s36
      %s39 = sphi 0, %s38
      %s53 = sphi 0, %s39
      %s57 = sphi 0, %s57
      %s59 = sphi 0, %s57
      %s60 = sphi 0, %s59
      %s74 = sphi 0, %s60
      %s82 = sphi 0, %s84
      %s85 = sphi 0, %s82
      %s86 = sphi 0, %s85
      %s102 = sphi 0, %s86
      %s108 = sphi 0, %s110
      %s111 = sphi 0, %s108
      %s112 = sphi 0, %s111
      %s128 = sphi 0, %s112
    $region4: #{tpu_custom_call.1} parent=1 // loop_header_branch
      %19 = sbr.rel (%p17) target = $region8
    $region5: #{tpu_custom_call.1} parent=1 // loop_body
      %s21 = ssub.s32 %s16, 1
      %s22 = ssub.s32 %s16, 2
      %s29 = sadd.s32 1, %s24
      %p30 = scmp.ge.s32.totalorder %s29, 1
      %s31 = scalar_select %p30, 0, %s29
      %s32 = sadd.s32 1, %s23
      %s33 = scalar_select %p30, %s32, %s23
      %p34 = scmp.ge.s32.totalorder %s33, 2
      %s35 = scalar_select %p34, 0, %s33
      %s37 = sadd.s32 %s36, 1
      %p40 = scmp.eq.s32.totalorder %s16, 1
      %p41 = scmp.ne.s32.totalorder %s36, %s38
      %p42 = scmp.eq.s32.totalorder %s16, 0
      %p43 = por %p41, %p42
      %p44 = scmp.ne.s32.totalorder %s36, %s38
      %p45 = scmp.eq.s32.totalorder %s21, 1
      %p46 = por %p44, %p45
      %p47 = scmp.ne.s32.totalorder %s38, %s39
      %p48 = scmp.eq.s32.totalorder %s21, 0
      %p49 = por %p47, %p48
      %p50 = scmp.ne.s32.totalorder %s38, %s39
      %p51 = scmp.eq.s32.totalorder %s22, 1
      %p52 = por %p50, %p51
      %p54 = scmp.ne.s32.totalorder %s39, %s53
      %p55 = scmp.eq.s32.totalorder %s22, 0
      %p56 = por %p54, %p55
      %s58 = sadd.s32 %s57, 1
      %p61 = scmp.eq.s32.totalorder %s16, 1
      %p62 = scmp.ne.s32.totalorder %s57, %s59
      %p63 = scmp.eq.s32.totalorder %s16, 0
      %p64 = por %p62, %p63
      %p65 = scmp.ne.s32.totalorder %s57, %s59
      %p66 = scmp.eq.s32.totalorder %s21, 1
      %p67 = por %p65, %p66
      %p68 = scmp.ne.s32.totalorder %s59, %s60
      %p69 = scmp.eq.s32.totalorder %s21, 0
      %p70 = por %p68, %p69
      %p71 = scmp.ne.s32.totalorder %s59, %s60
      %p72 = scmp.eq.s32.totalorder %s22, 1
      %p73 = por %p71, %p72
      %p75 = scmp.ne.s32.totalorder %s60, %s74
      %p76 = scmp.eq.s32.totalorder %s22, 0
      %p77 = por %p75, %p76
      %s78 = ssub.s32 %s23, %s35
      %s79 = ssub.s32 %s24, %s31
      %s80 = sor.u32 %s78, %s79
      %p81 = scmp.eq.s32.totalorder %s80, 0
      %s83 = sadd.s32 %s82, 1
      %s84 = scalar_select %p81, %s82, %s83
      %p87 = pneg %p81
      %p88 = scmp.eq.s32.totalorder %s16, 1
      %p89 = por %p87, %p88
      %p90 = scmp.ne.s32.totalorder %s82, %s85
      %p91 = scmp.eq.s32.totalorder %s16, 0
      %p92 = por %p90, %p91
      %p93 = scmp.ne.s32.totalorder %s82, %s85
      %p94 = scmp.eq.s32.totalorder %s21, 1
      %p95 = por %p93, %p94
      %p96 = scmp.ne.s32.totalorder %s85, %s86
      %p97 = scmp.eq.s32.totalorder %s21, 0
      %p98 = por %p96, %p97
      %p99 = scmp.ne.s32.totalorder %s85, %s86
      %p100 = scmp.eq.s32.totalorder %s22, 1
      %p101 = por %p99, %p100
      %p103 = scmp.ne.s32.totalorder %s86, %s102
      %p104 = scmp.eq.s32.totalorder %s22, 0
      %p105 = por %p103, %p104
      %s106 = ssub.s32 %s23, %s35
      %p107 = scmp.eq.s32.totalorder %s106, 0
      %s109 = sadd.s32 %s108, 1
      %s110 = scalar_select %p107, %s108, %s109
      %p113 = pneg %p107
      %p114 = scmp.eq.s32.totalorder %s16, 1
      %p115 = por %p113, %p114
      %p116 = scmp.ne.s32.totalorder %s108, %s111
      %p117 = scmp.eq.s32.totalorder %s16, 0
      %p118 = por %p116, %p117
      %p119 = scmp.ne.s32.totalorder %s108, %s111
      %p120 = scmp.eq.s32.totalorder %s21, 1
      %p121 = por %p119, %p120
      %p122 = scmp.ne.s32.totalorder %s111, %s112
      %p123 = scmp.eq.s32.totalorder %s21, 0
      %p124 = por %p122, %p123
      %p125 = scmp.ne.s32.totalorder %s111, %s112
      %p126 = scmp.eq.s32.totalorder %s22, 1
      %p127 = por %p125, %p126
      %p129 = scmp.ne.s32.totalorder %s112, %s128
      %p130 = scmp.eq.s32.totalorder %s22, 0
      %p131 = por %p129, %p130
      %p132 = scmp.le.s32.totalorder 1, %s16
      %p133 = scmp.lt.s32.totalorder %s16, 3
      %p134 = pnand %p132, %p133
      %p135 = pneg %p134
      // Predicated region
      $region9: #{tpu_custom_call.1} parent=5 // pred_check
        _
      $region10: #{tpu_custom_call.1} parent=5 // pred_check_branch
        %137 = sbr.rel (%p134) target = $region12
      $region11: #{tpu_custom_call.1} parent=5 // pred_region
        %s138 = ssub.s32 %s16, 1
        // Predicated region
        $region13: #{tpu_custom_call.1} parent=11 // pred_check
          %p139 = pneg %p49
        $region14: #{tpu_custom_call.1} parent=11 // pred_check_branch
          %141 = sbr.rel (%p139) target = $region16
        $region15: #{tpu_custom_call.1} parent=11 // pred_region
          %s143 = ssub.s32 16, 16
          %144 = vsyncadd [#allocation7], %s143
          %147 = dma.hbm_to_smem %s0, 16, [#allocation4], [#allocation7]
        $region16: #{tpu_custom_call.1} parent=11 // pred_fallthru
          _
        // Predicated region
        $region17: #{tpu_custom_call.1} parent=11 // pred_check
          %p148 = pneg %p70
        $region18: #{tpu_custom_call.1} parent=11 // pred_check_branch
          %150 = sbr.rel (%p148) target = $region20
        $region19: #{tpu_custom_call.1} parent=11 // pred_region
          _
        $region20: #{tpu_custom_call.1} parent=11 // pred_fallthru
          _
      $region12: #{tpu_custom_call.1} parent=5 // pred_fallthru
        _
      %p151 = scmp.lt.s32.totalorder %s16, 2
      // Predicated region
      $region21: #{tpu_custom_call.1} parent=5 // pred_check
        %p152 = pneg %p151
      $region22: #{tpu_custom_call.1} parent=5 // pred_check_branch
        %154 = sbr.rel (%p152) target = $region24
      $region23: #{tpu_custom_call.1} parent=5 // pred_region
        // Predicated region
        $region25: #{tpu_custom_call.1} parent=23 // pred_check
          %p155 = pneg %p92
        $region26: #{tpu_custom_call.1} parent=23 // pred_check_branch
          %157 = sbr.rel (%p155) target = $region28
        $region27: #{tpu_custom_call.1} parent=23 // pred_region
          %s158 = sand.u32 %s82, 1
          %s159 = scalar_lea.sflag [#allocation5], %s158
          %s160 = sand.u32 %s82, 1
          %s161 = smul.addr %s160, 8
          %s162 = scalar_lea.vmem [#allocation8], %s161
          %s164 = ssub.s32 128, 128
          %165 = vsyncadd %s159, %s164
          %s166 = smul.addr %s24, 2
          %s167 = smul.addr %s23, 2
          %s168 = sadd.s32 %s166, %s167
          %s169 = smul.addr %s168, 64
          %s170 = scalar_lea.hbm %s2, %s169
          %s172 = sshll.u32 %s162, 4
          %s173 = int_to_ptr.vmem [resolvable:$true] %s172
          %175 = dma.hbm_to_vmem [thread:$0]  %s170, 128, %s173, %s159
        $region28: #{tpu_custom_call.1} parent=23 // pred_fallthru
          _
      $region24: #{tpu_custom_call.1} parent=5 // pred_fallthru
        _
      %p176 = scmp.le.s32.totalorder 1, %s16
      %p177 = scmp.lt.s32.totalorder %s16, 3
      %p178 = pnand %p176, %p177
      %p179 = pneg %p178
      // Predicated region
      $region29: #{tpu_custom_call.1} parent=5 // pred_check
        _
      $region30: #{tpu_custom_call.1} parent=5 // pred_check_branch
        %181 = sbr.rel (%p178) target = $region32
      $region31: #{tpu_custom_call.1} parent=5 // pred_region
        %s182 = ssub.s32 %s16, 1
        // Predicated region
        $region33: #{tpu_custom_call.1} parent=31 // pred_check
          %p183 = pneg %p49
        $region34: #{tpu_custom_call.1} parent=31 // pred_check_branch
          %185 = sbr.rel (%p183) target = $region36
        $region35: #{tpu_custom_call.1} parent=31 // pred_region
          %186 = dma.done [#allocation7], 16
        $region36: #{tpu_custom_call.1} parent=31 // pred_fallthru
          _
        %s187 = sand.u32 %s85, 1
        %s188 = scalar_lea.sflag [#allocation5], %s187
        %s189 = sand.u32 %s85, 1
        %s190 = smul.addr %s189, 8
        %s191 = scalar_lea.vmem [#allocation8], %s190
        // Predicated region
        $region37: #{tpu_custom_call.1} parent=31 // pred_check
          %p192 = pneg %p98
        $region38: #{tpu_custom_call.1} parent=31 // pred_check_branch
          %194 = sbr.rel (%p192) target = $region40
        $region39: #{tpu_custom_call.1} parent=31 // pred_region
          %195 = dma.done %s188, 128
        $region40: #{tpu_custom_call.1} parent=31 // pred_fallthru
          _
        %196 = sfence
        %p197 = pneg %p49
        %p198 = pneg %p46
        %p199 = pneg %p70
        %p200 = pneg %p67
        %s201 = sand.u32 %s85, 1
        %s202 = scalar_lea.sflag [#allocation5], %s201
        %s203 = sand.u32 %s85, 1
        %s204 = smul.addr %s203, 8
        %s205 = scalar_lea.vmem [#allocation8], %s204
        %p206 = pneg %p98
        %p207 = pneg %p95
        %p208 = pneg %p124
        %p209 = pneg %p121
        %s210 = sand.u32 %s111, 1
        %s211 = scalar_lea.sflag [#allocation6], %s210
        %s212 = sand.u32 %s111, 1
        %s213 = smul.addr %s212, 2
        %s214 = scalar_lea.vmem [#allocation9], %s213
        %v215 = vld [vmem:[%s191] sm:$0xff]
        %v217 = vcombine.high %v215, %v215
        %vm219 = vcmask 1043456
        %v220 = vsel %vm219, %v215, 0.0
        %v221 = vrot.slane %v220, 4
        %v222 = vadd.f32 %v220, %v221
        %v223 = vrot.slane %v222, 2
        %v224 = vadd.f32 %v222, %v223
        %v225 = vrot.slane %v224, 1
        %v226 = vadd.f32 %v224, %v225
        %v227 = vsel %vm219, %v217, 0.0
        %v228 = vrot.slane %v227, 4
        %v229 = vadd.f32 %v227, %v228
        %v230 = vrot.slane %v229, 2
        %v231 = vadd.f32 %v229, %v230
        %v232 = vrot.slane %v231, 1
        %v233 = vadd.f32 %v231, %v232
        %v234 = vsel %vm219, %v215, -inf
        %v235 = vrot.slane %v234, 4
        %v236 = vmax.f32 %v234, %v235
        %v237 = vrot.slane %v236, 2
        %v238 = vmax.f32 %v236, %v237
        %v239 = vrot.slane %v238, 1
        %v240 = vmax.f32 %v238, %v239
        %v241 = vsel %vm219, %v217, -inf
        %v242 = vrot.slane %v241, 4
        %v243 = vmax.f32 %v241, %v242
        %v244 = vrot.slane %v243, 2
        %v245 = vmax.f32 %v243, %v244
        %v246 = vrot.slane %v245, 1
        %v247 = vmax.f32 %v245, %v246
        %p248 = scmp.eq.s32.totalorder %s26, 0
        // Predicated region
        $region41: #{tpu_custom_call.1} parent=31 // pred_check
          %p249 = pneg %p248
        $region42: #{tpu_custom_call.1} parent=31 // pred_check_branch
          %251 = sbr.rel (%p249) target = $region44
        $region43: #{tpu_custom_call.1} parent=31 // pred_region
          %v252 = vlaneseq
          %vm253 = vcmp.ge.s32.totalorder %v252, 0
          %vm254 = vcmp.lt.s32.totalorder %v252, 128
          %vm255 = vmand %vm253, %vm254
          %256 = vst.msk [vmem:[#allocation2] sm:$0x1] %vm255, 0.0
          %257 = vst.msk [vmem:[#allocation2 + $0x3] sm:$0x1] %vm255, 0.0
          %258 = vst.msk [vmem:[#allocation3] sm:$0x1] %vm255, 0.0
          %259 = vst.msk [vmem:[#allocation3 + $0x3] sm:$0x1] %vm255, 0.0
          %v262 = vcombine.low %v226, %v233
          %v264 = vunpack.c.l.s4 1966171168
          %v265 = vunpack.c.0.s8 %v264
          %v266 = vlaneseq
          %v267 = vshrl.u32 %v266, 7
          %v268 = vsub.s32 %v265, %v267
          %v269 = vrot.slane %v262, %v268
          %v271 = vunpack.c.l.s4 1966171168
          %v272 = vunpack.c.0.s8 %v271
          %v273 = vlaneseq
          %v274 = vshrl.u32 %v273, 7
          %v275 = vsub.s32 %v272, %v274
          %v276 = vrot.slane %v269, %v275
          %vm278 = vcmp.lt.s32.totalorder %v252, 256
          %vm279 = vmand %vm253, %vm278
          %280 = vst.msk [vmem:[#allocation2 + $0x1] sm:$0x3] %vm279, %v276
          %v283 = vcombine.low %v240, %v247
          %v285 = vunpack.c.l.s4 1966171168
          %v286 = vunpack.c.0.s8 %v285
          %v287 = vlaneseq
          %v288 = vshrl.u32 %v287, 7
          %v289 = vsub.s32 %v286, %v288
          %v290 = vrot.slane %v283, %v289
          %v292 = vunpack.c.l.s4 1966171168
          %v293 = vunpack.c.0.s8 %v292
          %v294 = vlaneseq
          %v295 = vshrl.u32 %v294, 7
          %v296 = vsub.s32 %v293, %v295
          %v297 = vrot.slane %v290, %v296
          %299 = vst.msk [vmem:[#allocation3 + $0x1] sm:$0x3] %vm279, %v297
        $region44: #{tpu_custom_call.1} parent=31 // pred_fallthru
          _
        %p300 = scmp.ne.s32.totalorder %s26, 0
        // Predicated region
        $region45: #{tpu_custom_call.1} parent=31 // pred_check
          %p301 = pneg %p300
        $region46: #{tpu_custom_call.1} parent=31 // pred_check_branch
          %303 = sbr.rel (%p301) target = $region48
        $region47: #{tpu_custom_call.1} parent=31 // pred_region
          %v304 = vld [vmem:[#allocation2 + $0x1] sm:$0x3]
          %v307 = vcombine.low %v226, %v233
          %v309 = vunpack.c.l.s4 1966171168
          %v310 = vunpack.c.0.s8 %v309
          %v311 = vlaneseq
          %v312 = vshrl.u32 %v311, 7
          %v313 = vsub.s32 %v310, %v312
          %v314 = vrot.slane %v307, %v313
          %v316 = vunpack.c.l.s4 1966171168
          %v317 = vunpack.c.0.s8 %v316
          %v318 = vlaneseq
          %v319 = vshrl.u32 %v318, 7
          %v320 = vsub.s32 %v317, %v319
          %v321 = vrot.slane %v314, %v320
          %v323 = vadd.f32 %v304, %v321
          %v324 = vlaneseq
          %vm325 = vcmp.ge.s32.totalorder %v324, 0
          %vm326 = vcmp.lt.s32.totalorder %v324, 256
          %vm327 = vmand %vm325, %vm326
          %328 = vst.msk [vmem:[#allocation2 + $0x1] sm:$0x3] %vm327, %v323
          %v329 = vld [vmem:[#allocation3 + $0x1] sm:$0x3]
          %v332 = vcombine.low %v240, %v247
          %v334 = vunpack.c.l.s4 1966171168
          %v335 = vunpack.c.0.s8 %v334
          %v336 = vlaneseq
          %v337 = vshrl.u32 %v336, 7
          %v338 = vsub.s32 %v335, %v337
          %v339 = vrot.slane %v332, %v338
          %v341 = vunpack.c.l.s4 1966171168
          %v342 = vunpack.c.0.s8 %v341
          %v343 = vlaneseq
          %v344 = vshrl.u32 %v343, 7
          %v345 = vsub.s32 %v342, %v344
          %v346 = vrot.slane %v339, %v345
          %v348 = vmax.f32 %v329, %v346
          %349 = vst.msk [vmem:[#allocation3 + $0x1] sm:$0x3] %vm327, %v348
        $region48: #{tpu_custom_call.1} parent=31 // pred_fallthru
          _
        // Predicated region
        $region49: #{tpu_custom_call.1} parent=31 // pred_check
          %p350 = pneg %p248
        $region50: #{tpu_custom_call.1} parent=31 // pred_check_branch
          %352 = sbr.rel (%p350) target = $region52
        $region51: #{tpu_custom_call.1} parent=31 // pred_region
          %v353 = vld [vmem:[%s1] sm:$0x3]
          %s354 = sld [smem:[#allocation4]]
          %v355 = vld [vmem:[#allocation2] sm:$0x7]
          %v356 = vstv %s354
          %v357 = vmul.f32 %v356, %v355
          %v358 = vadd.f32 %v357, 0.0
          %s359 = sld [smem:[#allocation4 + $0x31]]
          %v360 = vld [vmem:[#allocation3] sm:$0x7]
          %v361 = vstv %s359
          %v362 = vmul.f32 %v361, %v360
          %v363 = vadd.f32 %v362, 0.0
          %s364 = sld [smem:[#allocation4 + $0x7]]
          %v365 = vstv %s364
          %v366 = vmul.f32 %v365, %v355
          %368 = vrot.lane.b32.xlu0 %v366, 112
          %v369 = vpop.permute.xlu0 %368
          %v370 = vrot.slane %v369, 1
          %vm371 = vcmask 916480
          %v372 = vsel %vm371, %v369, %v370
          %v374 = vadd.f32 %v358, %v372
          %s375 = sld [smem:[#allocation4 + $0x38]]
          %v376 = vstv %s375
          %v377 = vmul.f32 %v376, %v360
          %379 = vrot.lane.b32.xlu0 %v377, 112
          %v380 = vpop.permute.xlu0 %379
          %v381 = vrot.slane %v380, 1
          %v382 = vsel %vm371, %v380, %v381
          %v384 = vadd.f32 %v363, %v382
          %s385 = sld [smem:[#allocation4 + $0xe]]
          %v386 = vstv %s385
          %v387 = vmul.f32 %v386, %v355
          %389 = vrot.lane.b32.xlu0 %v387, 96
          %v390 = vpop.permute.xlu0 %389
          %v391 = vrot.slane %v390, 1
          %vm392 = vcmask 785408
          %v393 = vsel %vm392, %v390, %v391
          %v395 = vadd.f32 %v374, %v393
          %s396 = sld [smem:[#allocation4 + $0x3f]]
          %v397 = vstv %s396
          %v398 = vmul.f32 %v397, %v360
          %400 = vrot.lane.b32.xlu0 %v398, 96
          %v401 = vpop.permute.xlu0 %400
          %v402 = vrot.slane %v401, 1
          %v403 = vsel %vm392, %v401, %v402
          %v405 = vadd.f32 %v384, %v403
          %s406 = sld [smem:[#allocation4 + $0x15]]
          %v407 = vstv %s406
          %v408 = vmul.f32 %v407, %v355
          %410 = vrot.lane.b32.xlu0 %v408, 80
          %v411 = vpop.permute.xlu0 %410
          %v412 = vrot.slane %v411, 1
          %vm413 = vcmask 654336
          %v414 = vsel %vm413, %v411, %v412
          %v416 = vadd.f32 %v395, %v414
          %s417 = sld [smem:[#allocation4 + $0x46]]
          %v418 = vstv %s417
          %v419 = vmul.f32 %v418, %v360
          %421 = vrot.lane.b32.xlu0 %v419, 80
          %v422 = vpop.permute.xlu0 %421
          %v423 = vrot.slane %v422, 1
          %v424 = vsel %vm413, %v422, %v423
          %v426 = vadd.f32 %v405, %v424
          %s427 = sld [smem:[#allocation4 + $0x1c]]
          %v428 = vld [vmem:[#allocation2 + $0x1] sm:$0x7]
          %v429 = vstv %s427
          %v430 = vmul.f32 %v429, %v428
          %432 = vrot.lane.b32.xlu0 %v430, 64
          %v433 = vpop.permute.xlu0 %432
          %v434 = vrot.slane %v433, 7
          %vm435 = vcmask 523264
          %v436 = vsel %vm435, %v434, %v433
          %v438 = vadd.f32 %v416, %v436
          %s439 = sld [smem:[#allocation4 + $0x4d]]
          %v440 = vld [vmem:[#allocation3 + $0x1] sm:$0x7]
          %v441 = vstv %s439
          %v442 = vmul.f32 %v441, %v440
          %444 = vrot.lane.b32.xlu0 %v442, 64
          %v445 = vpop.permute.xlu0 %444
          %v446 = vrot.slane %v445, 7
          %v447 = vsel %vm435, %v446, %v445
          %v449 = vadd.f32 %v426, %v447
          %s450 = sld [smem:[#allocation4 + $0x23]]
          %v451 = vstv %s450
          %v452 = vmul.f32 %v451, %v428
          %454 = vrot.lane.b32.xlu0 %v452, 48
          %v455 = vpop.permute.xlu0 %454
          %v456 = vrot.slane %v455, 7
          %vm457 = vcmask 392192
          %v458 = vsel %vm457, %v456, %v455
          %v460 = vadd.f32 %v438, %v458
          %s461 = sld [smem:[#allocation4 + $0x54]]
          %v462 = vstv %s461
          %v463 = vmul.f32 %v462, %v440
          %465 = vrot.lane.b32.xlu0 %v463, 48
          %v466 = vpop.permute.xlu0 %465
          %v467 = vrot.slane %v466, 7
          %v468 = vsel %vm457, %v467, %v466
          %v470 = vadd.f32 %v449, %v468
          %s471 = sld [smem:[#allocation4 + $0x2a]]
          %v472 = vstv %s471
          %v473 = vmul.f32 %v472, %v428
          %475 = vrot.lane.b32.xlu0 %v473, 32
          %v476 = vpop.permute.xlu0 %475
          %v477 = vrot.slane %v476, 7
          %vm478 = vcmask 261120
          %v479 = vsel %vm478, %v477, %v476
          %v481 = vadd.f32 %v460, %v479
          %s482 = sld [smem:[#allocation4 + $0x5b]]
          %v483 = vstv %s482
          %v484 = vmul.f32 %v483, %v440
          %486 = vrot.lane.b32.xlu0 %v484, 32
          %v487 = vpop.permute.xlu0 %486
          %v488 = vrot.slane %v487, 7
          %v489 = vsel %vm478, %v488, %v487
          %v491 = vadd.f32 %v470, %v489
          %v492 = vadd.f32 %v481, %v491
          %vm493 = vcmp.ge.s32.totalorder %v353, 3
          %495 = vrot.lane.b32.xlu0 %v492, 51
          %v496 = vpop.permute.xlu0 %495
          %v497 = vrot.slane %v496, 1
          %vm498 = vcmask 416768
          %v499 = vsel %vm498, %v496, %v497
          %v501 = vsel %vm493, %v499, 0.0
          %v502 = vadd.f32 %v501, 0.0
          %s503 = sld [smem:[#allocation4 + $0x1]]
          %v504 = vstv %s503
          %v505 = vmul.f32 %v504, %v355
          %v506 = vadd.f32 %v505, 0.0
          %s507 = sld [smem:[#allocation4 + $0x32]]
          %v508 = vstv %s507
          %v509 = vmul.f32 %v508, %v360
          %v510 = vadd.f32 %v509, 0.0
          %s511 = sld [smem:[#allocation4 + $0x8]]
          %v512 = vstv %s511
          %v513 = vmul.f32 %v512, %v355
          %515 = vrot.lane.b32.xlu0 %v513, 112
          %v516 = vpop.permute.xlu0 %515
          %v517 = vrot.slane %v516, 1
          %v518 = vsel %vm371, %v516, %v517
          %v520 = vadd.f32 %v506, %v518
          %s521 = sld [smem:[#allocation4 + $0x39]]
          %v522 = vstv %s521
          %v523 = vmul.f32 %v522, %v360
          %525 = vrot.lane.b32.xlu0 %v523, 112
          %v526 = vpop.permute.xlu0 %525
          %v527 = vrot.slane %v526, 1
          %v528 = vsel %vm371, %v526, %v527
          %v530 = vadd.f32 %v510, %v528
          %s531 = sld [smem:[#allocation4 + $0xf]]
          %v532 = vstv %s531
          %v533 = vmul.f32 %v532, %v355
          %535 = vrot.lane.b32.xlu0 %v533, 96
          %v536 = vpop.permute.xlu0 %535
          %v537 = vrot.slane %v536, 1
          %v538 = vsel %vm392, %v536, %v537
          %v540 = vadd.f32 %v520, %v538
          %s541 = sld [smem:[#allocation4 + $0x40]]
          %v542 = vstv %s541
          %v543 = vmul.f32 %v542, %v360
          %545 = vrot.lane.b32.xlu0 %v543, 96
          %v546 = vpop.permute.xlu0 %545
          %v547 = vrot.slane %v546, 1
          %v548 = vsel %vm392, %v546, %v547
          %v550 = vadd.f32 %v530, %v548
          %s551 = sld [smem:[#allocation4 + $0x16]]
          %v552 = vstv %s551
          %v553 = vmul.f32 %v552, %v355
          %555 = vrot.lane.b32.xlu0 %v553, 80
          %v556 = vpop.permute.xlu0 %555
          %v557 = vrot.slane %v556, 1
          %v558 = vsel %vm413, %v556, %v557
          %v560 = vadd.f32 %v540, %v558
          %s561 = sld [smem:[#allocation4 + $0x47]]
          %v562 = vstv %s561
          %v563 = vmul.f32 %v562, %v360
          %565 = vrot.lane.b32.xlu0 %v563, 80
          %v566 = vpop.permute.xlu0 %565
          %v567 = vrot.slane %v566, 1
          %v568 = vsel %vm413, %v566, %v567
          %v570 = vadd.f32 %v550, %v568
          %s571 = sld [smem:[#allocation4 + $0x1d]]
          %v572 = vstv %s571
          %v573 = vmul.f32 %v572, %v428
          %575 = vrot.lane.b32.xlu0 %v573, 64
          %v576 = vpop.permute.xlu0 %575
          %v577 = vrot.slane %v576, 7
          %v578 = vsel %vm435, %v577, %v576
          %v580 = vadd.f32 %v560, %v578
          %s581 = sld [smem:[#allocation4 + $0x4e]]
          %v582 = vstv %s581
          %v583 = vmul.f32 %v582, %v440
          %585 = vrot.lane.b32.xlu0 %v583, 64
          %v586 = vpop.permute.xlu0 %585
          %v587 = vrot.slane %v586, 7
          %v588 = vsel %vm435, %v587, %v586
          %v590 = vadd.f32 %v570, %v588
          %s591 = sld [smem:[#allocation4 + $0x24]]
          %v592 = vstv %s591
          %v593 = vmul.f32 %v592, %v428
          %595 = vrot.lane.b32.xlu0 %v593, 48
          %v596 = vpop.permute.xlu0 %595
          %v597 = vrot.slane %v596, 7
          %v598 = vsel %vm457, %v597, %v596
          %v600 = vadd.f32 %v580, %v598
          %s601 = sld [smem:[#allocation4 + $0x55]]
          %v602 = vstv %s601
          %v603 = vmul.f32 %v602, %v440
          %605 = vrot.lane.b32.xlu0 %v603, 48
          %v606 = vpop.permute.xlu0 %605
          %v607 = vrot.slane %v606, 7
          %v608 = vsel %vm457, %v607, %v606
          %v610 = vadd.f32 %v590, %v608
          %s611 = sld [smem:[#allocation4 + $0x2b]]
          %v612 = vstv %s611
          %v613 = vmul.f32 %v612, %v428
          %615 = vrot.lane.b32.xlu0 %v613, 32
          %v616 = vpop.permute.xlu0 %615
          %v617 = vrot.slane %v616, 7
          %v618 = vsel %vm478, %v617, %v616
          %v620 = vadd.f32 %v600, %v618
          %s621 = sld [smem:[#allocation4 + $0x5c]]
          %v622 = vstv %s621
          %v623 = vmul.f32 %v622, %v440
          %625 = vrot.lane.b32.xlu0 %v623, 32
          %v626 = vpop.permute.xlu0 %625
          %v627 = vrot.slane %v626, 7
          %v628 = vsel %vm478, %v627, %v626
          %v630 = vadd.f32 %v610, %v628
          %v631 = vadd.f32 %v620, %v630
          %vm632 = vcmp.ge.s32.totalorder %v353, 2
          %634 = vrot.lane.b32.xlu0 %v631, 50
          %v635 = vpop.permute.xlu0 %634
          %v636 = vrot.slane %v635, 1
          %vm637 = vcmask 408576
          %v638 = vsel %vm637, %v635, %v636
          %v640 = vsel %vm632, %v638, 0.0
          %v641 = vadd.f32 %v502, %v640
          %s642 = sld [smem:[#allocation4 + $0x2]]
          %v643 = vstv %s642
          %v644 = vmul.f32 %v643, %v355
          %v645 = vadd.f32 %v644, 0.0
          %s646 = sld [smem:[#allocation4 + $0x33]]
          %v647 = vstv %s646
          %v648 = vmul.f32 %v647, %v360
          %v649 = vadd.f32 %v648, 0.0
          %s650 = sld [smem:[#allocation4 + $0x9]]
          %v651 = vstv %s650
          %v652 = vmul.f32 %v651, %v355
          %654 = vrot.lane.b32.xlu0 %v652, 112
          %v655 = vpop.permute.xlu0 %654
          %v656 = vrot.slane %v655, 1
          %v657 = vsel %vm371, %v655, %v656
          %v659 = vadd.f32 %v645, %v657
          %s660 = sld [smem:[#allocation4 + $0x3a]]
          %v661 = vstv %s660
          %v662 = vmul.f32 %v661, %v360
          %664 = vrot.lane.b32.xlu0 %v662, 112
          %v665 = vpop.permute.xlu0 %664
          %v666 = vrot.slane %v665, 1
          %v667 = vsel %vm371, %v665, %v666
          %v669 = vadd.f32 %v649, %v667
          %s670 = sld [smem:[#allocation4 + $0x10]]
          %v671 = vstv %s670
          %v672 = vmul.f32 %v671, %v355
          %674 = vrot.lane.b32.xlu0 %v672, 96
          %v675 = vpop.permute.xlu0 %674
          %v676 = vrot.slane %v675, 1
          %v677 = vsel %vm392, %v675, %v676
          %v679 = vadd.f32 %v659, %v677
          %s680 = sld [smem:[#allocation4 + $0x41]]
          %v681 = vstv %s680
          %v682 = vmul.f32 %v681, %v360
          %684 = vrot.lane.b32.xlu0 %v682, 96
          %v685 = vpop.permute.xlu0 %684
          %v686 = vrot.slane %v685, 1
          %v687 = vsel %vm392, %v685, %v686
          %v689 = vadd.f32 %v669, %v687
          %s690 = sld [smem:[#allocation4 + $0x17]]
          %v691 = vstv %s690
          %v692 = vmul.f32 %v691, %v355
          %694 = vrot.lane.b32.xlu0 %v692, 80
          %v695 = vpop.permute.xlu0 %694
          %v696 = vrot.slane %v695, 1
          %v697 = vsel %vm413, %v695, %v696
          %v699 = vadd.f32 %v679, %v697
          %s700 = sld [smem:[#allocation4 + $0x48]]
          %v701 = vstv %s700
          %v702 = vmul.f32 %v701, %v360
          %704 = vrot.lane.b32.xlu0 %v702, 80
          %v705 = vpop.permute.xlu0 %704
          %v706 = vrot.slane %v705, 1
          %v707 = vsel %vm413, %v705, %v706
          %v709 = vadd.f32 %v689, %v707
          %s710 = sld [smem:[#allocation4 + $0x1e]]
          %v711 = vstv %s710
          %v712 = vmul.f32 %v711, %v428
          %714 = vrot.lane.b32.xlu0 %v712, 64
          %v715 = vpop.permute.xlu0 %714
          %v716 = vrot.slane %v715, 7
          %v717 = vsel %vm435, %v716, %v715
          %v719 = vadd.f32 %v699, %v717
          %s720 = sld [smem:[#allocation4 + $0x4f]]
          %v721 = vstv %s720
          %v722 = vmul.f32 %v721, %v440
          %724 = vrot.lane.b32.xlu0 %v722, 64
          %v725 = vpop.permute.xlu0 %724
          %v726 = vrot.slane %v725, 7
          %v727 = vsel %vm435, %v726, %v725
          %v729 = vadd.f32 %v709, %v727
          %s730 = sld [smem:[#allocation4 + $0x25]]
          %v731 = vstv %s730
          %v732 = vmul.f32 %v731, %v428
          %734 = vrot.lane.b32.xlu0 %v732, 48
          %v735 = vpop.permute.xlu0 %734
          %v736 = vrot.slane %v735, 7
          %v737 = vsel %vm457, %v736, %v735
          %v739 = vadd.f32 %v719, %v737
          %s740 = sld [smem:[#allocation4 + $0x56]]
          %v741 = vstv %s740
          %v742 = vmul.f32 %v741, %v440
          %744 = vrot.lane.b32.xlu0 %v742, 48
          %v745 = vpop.permute.xlu0 %744
          %v746 = vrot.slane %v745, 7
          %v747 = vsel %vm457, %v746, %v745
          %v749 = vadd.f32 %v729, %v747
          %s750 = sld [smem:[#allocation4 + $0x2c]]
          %v751 = vstv %s750
          %v752 = vmul.f32 %v751, %v428
          %754 = vrot.lane.b32.xlu0 %v752, 32
          %v755 = vpop.permute.xlu0 %754
          %v756 = vrot.slane %v755, 7
          %v757 = vsel %vm478, %v756, %v755
          %v759 = vadd.f32 %v739, %v757
          %s760 = sld [smem:[#allocation4 + $0x5d]]
          %v761 = vstv %s760
          %v762 = vmul.f32 %v761, %v440
          %764 = vrot.lane.b32.xlu0 %v762, 32
          %v765 = vpop.permute.xlu0 %764
          %v766 = vrot.slane %v765, 7
          %v767 = vsel %vm478, %v766, %v765
          %v769 = vadd.f32 %v749, %v767
          %v770 = vadd.f32 %v759, %v769
          %vm771 = vcmp.ge.s32.totalorder %v353, 1
          %773 = vrot.lane.b32.xlu0 %v770, 49
          %v774 = vpop.permute.xlu0 %773
          %v775 = vrot.slane %v774, 1
          %vm776 = vcmask 400384
          %v777 = vsel %vm776, %v774, %v775
          %v779 = vsel %vm771, %v777, 0.0
          %v780 = vadd.f32 %v641, %v779
          %s781 = sld [smem:[#allocation4 + $0x3]]
          %v782 = vstv %s781
          %v783 = vmul.f32 %v782, %v355
          %v784 = vadd.f32 %v783, 0.0
          %s785 = sld [smem:[#allocation4 + $0x34]]
          %v786 = vstv %s785
          %v787 = vmul.f32 %v786, %v360
          %v788 = vadd.f32 %v787, 0.0
          %s789 = sld [smem:[#allocation4 + $0xa]]
          %v790 = vstv %s789
          %v791 = vmul.f32 %v790, %v355
          %793 = vrot.lane.b32.xlu0 %v791, 112
          %v794 = vpop.permute.xlu0 %793
          %v795 = vrot.slane %v794, 1
          %v796 = vsel %vm371, %v794, %v795
          %v798 = vadd.f32 %v784, %v796
          %s799 = sld [smem:[#allocation4 + $0x3b]]
          %v800 = vstv %s799
          %v801 = vmul.f32 %v800, %v360
          %803 = vrot.lane.b32.xlu0 %v801, 112
          %v804 = vpop.permute.xlu0 %803
          %v805 = vrot.slane %v804, 1
          %v806 = vsel %vm371, %v804, %v805
          %v808 = vadd.f32 %v788, %v806
          %s809 = sld [smem:[#allocation4 + $0x11]]
          %v810 = vstv %s809
          %v811 = vmul.f32 %v810, %v355
          %813 = vrot.lane.b32.xlu0 %v811, 96
          %v814 = vpop.permute.xlu0 %813
          %v815 = vrot.slane %v814, 1
          %v816 = vsel %vm392, %v814, %v815
          %v818 = vadd.f32 %v798, %v816
          %s819 = sld [smem:[#allocation4 + $0x42]]
          %v820 = vstv %s819
          %v821 = vmul.f32 %v820, %v360
          %823 = vrot.lane.b32.xlu0 %v821, 96
          %v824 = vpop.permute.xlu0 %823
          %v825 = vrot.slane %v824, 1
          %v826 = vsel %vm392, %v824, %v825
          %v828 = vadd.f32 %v808, %v826
          %s829 = sld [smem:[#allocation4 + $0x18]]
          %v830 = vld [vmem:[#allocation2 + $0x1] sm:$0x3]
          %v831 = vstv %s829
          %v832 = vmul.f32 %v831, %v830
          %834 = vrot.lane.b32.xlu0 %v832, 80
          %v835 = vpop.permute.xlu0 %834
          %v836 = vrot.slane %v835, 7
          %v837 = vsel %vm413, %v836, %v835
          %v839 = vadd.f32 %v818, %v837
          %s840 = sld [smem:[#allocation4 + $0x49]]
          %v841 = vld [vmem:[#allocation3 + $0x1] sm:$0x3]
          %v842 = vstv %s840
          %v843 = vmul.f32 %v842, %v841
          %845 = vrot.lane.b32.xlu0 %v843, 80
          %v846 = vpop.permute.xlu0 %845
          %v847 = vrot.slane %v846, 7
          %v848 = vsel %vm413, %v847, %v846
          %v850 = vadd.f32 %v828, %v848
          %s851 = sld [smem:[#allocation4 + $0x1f]]
          %v852 = vstv %s851
          %v853 = vmul.f32 %v852, %v428
          %855 = vrot.lane.b32.xlu0 %v853, 64
          %v856 = vpop.permute.xlu0 %855
          %v857 = vrot.slane %v856, 7
          %v858 = vsel %vm435, %v857, %v856
          %v860 = vadd.f32 %v839, %v858
          %s861 = sld [smem:[#allocation4 + $0x50]]
          %v862 = vstv %s861
          %v863 = vmul.f32 %v862, %v440
          %865 = vrot.lane.b32.xlu0 %v863, 64
          %v866 = vpop.permute.xlu0 %865
          %v867 = vrot.slane %v866, 7
          %v868 = vsel %vm435, %v867, %v866
          %v870 = vadd.f32 %v850, %v868
          %s871 = sld [smem:[#allocation4 + $0x26]]
          %v872 = vstv %s871
          %v873 = vmul.f32 %v872, %v428
          %875 = vrot.lane.b32.xlu0 %v873, 48
          %v876 = vpop.permute.xlu0 %875
          %v877 = vrot.slane %v876, 7
          %v878 = vsel %vm457, %v877, %v876
          %v880 = vadd.f32 %v860, %v878
          %s881 = sld [smem:[#allocation4 + $0x57]]
          %v882 = vstv %s881
          %v883 = vmul.f32 %v882, %v440
          %885 = vrot.lane.b32.xlu0 %v883, 48
          %v886 = vpop.permute.xlu0 %885
          %v887 = vrot.slane %v886, 7
          %v888 = vsel %vm457, %v887, %v886
          %v890 = vadd.f32 %v870, %v888
          %s891 = sld [smem:[#allocation4 + $0x2d]]
          %v892 = vstv %s891
          %v893 = vmul.f32 %v892, %v428
          %895 = vrot.lane.b32.xlu0 %v893, 32
          %v896 = vpop.permute.xlu0 %895
          %v897 = vrot.slane %v896, 7
          %v898 = vsel %vm478, %v897, %v896
          %v900 = vadd.f32 %v880, %v898
          %s901 = sld [smem:[#allocation4 + $0x5e]]
          %v902 = vstv %s901
          %v903 = vmul.f32 %v902, %v440
          %905 = vrot.lane.b32.xlu0 %v903, 32
          %v906 = vpop.permute.xlu0 %905
          %v907 = vrot.slane %v906, 7
          %v908 = vsel %vm478, %v907, %v906
          %v910 = vadd.f32 %v890, %v908
          %v911 = vadd.f32 %v900, %v910
          %913 = vrot.lane.b32.xlu0 %v911, 48
          %v914 = vpop.permute.xlu0 %913
          %v915 = vrot.slane %v914, 1
          %v916 = vsel %vm457, %v914, %v915
          %v918 = vadd.f32 %v780, %v916
          %s919 = sld [smem:[#allocation4 + $0x4]]
          %v920 = vstv %s919
          %v921 = vmul.f32 %v920, %v355
          %v922 = vadd.f32 %v921, 0.0
          %s923 = sld [smem:[#allocation4 + $0x35]]
          %v924 = vstv %s923
          %v925 = vmul.f32 %v924, %v360
          %v926 = vadd.f32 %v925, 0.0
          %s927 = sld [smem:[#allocation4 + $0xb]]
          %v928 = vstv %s927
          %v929 = vmul.f32 %v928, %v355
          %931 = vrot.lane.b32.xlu0 %v929, 112
          %v932 = vpop.permute.xlu0 %931
          %v933 = vrot.slane %v932, 1
          %v934 = vsel %vm371, %v932, %v933
          %v936 = vadd.f32 %v922, %v934
          %s937 = sld [smem:[#allocation4 + $0x3c]]
          %v938 = vstv %s937
          %v939 = vmul.f32 %v938, %v360
          %941 = vrot.lane.b32.xlu0 %v939, 112
          %v942 = vpop.permute.xlu0 %941
          %v943 = vrot.slane %v942, 1
          %v944 = vsel %vm371, %v942, %v943
          %v946 = vadd.f32 %v926, %v944
          %s947 = sld [smem:[#allocation4 + $0x12]]
          %v948 = vstv %s947
          %v949 = vmul.f32 %v948, %v355
          %951 = vrot.lane.b32.xlu0 %v949, 96
          %v952 = vpop.permute.xlu0 %951
          %v953 = vrot.slane %v952, 1
          %v954 = vsel %vm392, %v952, %v953
          %v956 = vadd.f32 %v936, %v954
          %s957 = sld [smem:[#allocation4 + $0x43]]
          %v958 = vstv %s957
          %v959 = vmul.f32 %v958, %v360
          %961 = vrot.lane.b32.xlu0 %v959, 96
          %v962 = vpop.permute.xlu0 %961
          %v963 = vrot.slane %v962, 1
          %v964 = vsel %vm392, %v962, %v963
          %v966 = vadd.f32 %v946, %v964
          %s967 = sld [smem:[#allocation4 + $0x19]]
          %v968 = vstv %s967
          %v969 = vmul.f32 %v968, %v428
          %971 = vrot.lane.b32.xlu0 %v969, 80
          %v972 = vpop.permute.xlu0 %971
          %v973 = vrot.slane %v972, 7
          %v974 = vsel %vm413, %v973, %v972
          %v976 = vadd.f32 %v956, %v974
          %s977 = sld [smem:[#allocation4 + $0x4a]]
          %v978 = vstv %s977
          %v979 = vmul.f32 %v978, %v440
          %981 = vrot.lane.b32.xlu0 %v979, 80
          %v982 = vpop.permute.xlu0 %981
          %v983 = vrot.slane %v982, 7
          %v984 = vsel %vm413, %v983, %v982
          %v986 = vadd.f32 %v966, %v984
          %s987 = sld [smem:[#allocation4 + $0x20]]
          %v988 = vstv %s987
          %v989 = vmul.f32 %v988, %v428
          %991 = vrot.lane.b32.xlu0 %v989, 64
          %v992 = vpop.permute.xlu0 %991
          %v993 = vrot.slane %v992, 7
          %v994 = vsel %vm435, %v993, %v992
          %v996 = vadd.f32 %v976, %v994
          %s997 = sld [smem:[#allocation4 + $0x51]]
          %v998 = vstv %s997
          %v999 = vmul.f32 %v998, %v440
          %1001 = vrot.lane.b32.xlu0 %v999, 64
          %v1002 = vpop.permute.xlu0 %1001
          %v1003 = vrot.slane %v1002, 7
          %v1004 = vsel %vm435, %v1003, %v1002
          %v1006 = vadd.f32 %v986, %v1004
          %s1007 = sld [smem:[#allocation4 + $0x27]]
          %v1008 = vstv %s1007
          %v1009 = vmul.f32 %v1008, %v428
          %1011 = vrot.lane.b32.xlu0 %v1009, 48
          %v1012 = vpop.permute.xlu0 %1011
          %v1013 = vrot.slane %v1012, 7
          %v1014 = vsel %vm457, %v1013, %v1012
          %v1016 = vadd.f32 %v996, %v1014
          %s1017 = sld [smem:[#allocation4 + $0x58]]
          %v1018 = vstv %s1017
          %v1019 = vmul.f32 %v1018, %v440
          %1021 = vrot.lane.b32.xlu0 %v1019, 48
          %v1022 = vpop.permute.xlu0 %1021
          %v1023 = vrot.slane %v1022, 7
          %v1024 = vsel %vm457, %v1023, %v1022
          %v1026 = vadd.f32 %v1006, %v1024
          %s1027 = sld [smem:[#allocation4 + $0x2e]]
          %v1028 = vstv %s1027
          %v1029 = vmul.f32 %v1028, %v428
          %1031 = vrot.lane.b32.xlu0 %v1029, 32
          %v1032 = vpop.permute.xlu0 %1031
          %v1033 = vrot.slane %v1032, 7
          %v1034 = vsel %vm478, %v1033, %v1032
          %v1036 = vadd.f32 %v1016, %v1034
          %s1037 = sld [smem:[#allocation4 + $0x5f]]
          %v1038 = vstv %s1037
          %v1039 = vmul.f32 %v1038, %v440
          %1041 = vrot.lane.b32.xlu0 %v1039, 32
          %v1042 = vpop.permute.xlu0 %1041
          %v1043 = vrot.slane %v1042, 7
          %v1044 = vsel %vm478, %v1043, %v1042
          %v1046 = vadd.f32 %v1026, %v1044
          %v1047 = vadd.f32 %v1036, %v1046
          %vm1048 = vcmp.lt.s32.totalorder %v353, 15
          %1050 = vrot.lane.b32.xlu0 %v1047, 47
          %v1051 = vpop.permute.xlu0 %1050
          %v1052 = vrot.slane %v1051, 1
          %vm1053 = vcmask 384000
          %v1054 = vsel %vm1053, %v1051, %v1052
          %v1056 = vsel %vm1048, %v1054, 0.0
          %v1057 = vadd.f32 %v918, %v1056
          %s1058 = sld [smem:[#allocation4 + $0x5]]
          %v1059 = vstv %s1058
          %v1060 = vmul.f32 %v1059, %v355
          %v1061 = vadd.f32 %v1060, 0.0
          %s1062 = sld [smem:[#allocation4 + $0x36]]
          %v1063 = vstv %s1062
          %v1064 = vmul.f32 %v1063, %v360
          %v1065 = vadd.f32 %v1064, 0.0
          %s1066 = sld [smem:[#allocation4 + $0xc]]
          %v1067 = vstv %s1066
          %v1068 = vmul.f32 %v1067, %v355
          %1070 = vrot.lane.b32.xlu0 %v1068, 112
          %v1071 = vpop.permute.xlu0 %1070
          %v1072 = vrot.slane %v1071, 1
          %v1073 = vsel %vm371, %v1071, %v1072
          %v1075 = vadd.f32 %v1061, %v1073
          %s1076 = sld [smem:[#allocation4 + $0x3d]]
          %v1077 = vstv %s1076
          %v1078 = vmul.f32 %v1077, %v360
          %1080 = vrot.lane.b32.xlu0 %v1078, 112
          %v1081 = vpop.permute.xlu0 %1080
          %v1082 = vrot.slane %v1081, 1
          %v1083 = vsel %vm371, %v1081, %v1082
          %v1085 = vadd.f32 %v1065, %v1083
          %s1086 = sld [smem:[#allocation4 + $0x13]]
          %v1087 = vstv %s1086
          %v1088 = vmul.f32 %v1087, %v355
          %1090 = vrot.lane.b32.xlu0 %v1088, 96
          %v1091 = vpop.permute.xlu0 %1090
          %v1092 = vrot.slane %v1091, 1
          %v1093 = vsel %vm392, %v1091, %v1092
          %v1095 = vadd.f32 %v1075, %v1093
          %s1096 = sld [smem:[#allocation4 + $0x44]]
          %v1097 = vstv %s1096
          %v1098 = vmul.f32 %v1097, %v360
          %1100 = vrot.lane.b32.xlu0 %v1098, 96
          %v1101 = vpop.permute.xlu0 %1100
          %v1102 = vrot.slane %v1101, 1
          %v1103 = vsel %vm392, %v1101, %v1102
          %v1105 = vadd.f32 %v1085, %v1103
          %s1106 = sld [smem:[#allocation4 + $0x1a]]
          %v1107 = vstv %s1106
          %v1108 = vmul.f32 %v1107, %v428
          %1110 = vrot.lane.b32.xlu0 %v1108, 80
          %v1111 = vpop.permute.xlu0 %1110
          %v1112 = vrot.slane %v1111, 7
          %v1113 = vsel %vm413, %v1112, %v1111
          %v1115 = vadd.f32 %v1095, %v1113
          %s1116 = sld [smem:[#allocation4 + $0x4b]]
          %v1117 = vstv %s1116
          %v1118 = vmul.f32 %v1117, %v440
          %1120 = vrot.lane.b32.xlu0 %v1118, 80
          %v1121 = vpop.permute.xlu0 %1120
          %v1122 = vrot.slane %v1121, 7
          %v1123 = vsel %vm413, %v1122, %v1121
          %v1125 = vadd.f32 %v1105, %v1123
          %s1126 = sld [smem:[#allocation4 + $0x21]]
          %v1127 = vstv %s1126
          %v1128 = vmul.f32 %v1127, %v428
          %1130 = vrot.lane.b32.xlu0 %v1128, 64
          %v1131 = vpop.permute.xlu0 %1130
          %v1132 = vrot.slane %v1131, 7
          %v1133 = vsel %vm435, %v1132, %v1131
          %v1135 = vadd.f32 %v1115, %v1133
          %s1136 = sld [smem:[#allocation4 + $0x52]]
          %v1137 = vstv %s1136
          %v1138 = vmul.f32 %v1137, %v440
          %1140 = vrot.lane.b32.xlu0 %v1138, 64
          %v1141 = vpop.permute.xlu0 %1140
          %v1142 = vrot.slane %v1141, 7
          %v1143 = vsel %vm435, %v1142, %v1141
          %v1145 = vadd.f32 %v1125, %v1143
          %s1146 = sld [smem:[#allocation4 + $0x28]]
          %v1147 = vstv %s1146
          %v1148 = vmul.f32 %v1147, %v428
          %1150 = vrot.lane.b32.xlu0 %v1148, 48
          %v1151 = vpop.permute.xlu0 %1150
          %v1152 = vrot.slane %v1151, 7
          %v1153 = vsel %vm457, %v1152, %v1151
          %v1155 = vadd.f32 %v1135, %v1153
          %s1156 = sld [smem:[#allocation4 + $0x59]]
          %v1157 = vstv %s1156
          %v1158 = vmul.f32 %v1157, %v440
          %1160 = vrot.lane.b32.xlu0 %v1158, 48
          %v1161 = vpop.permute.xlu0 %1160
          %v1162 = vrot.slane %v1161, 7
          %v1163 = vsel %vm457, %v1162, %v1161
          %v1165 = vadd.f32 %v1145, %v1163
          %s1166 = sld [smem:[#allocation4 + $0x2f]]
          %v1167 = vstv %s1166
          %v1168 = vmul.f32 %v1167, %v428
          %1170 = vrot.lane.b32.xlu0 %v1168, 32
          %v1171 = vpop.permute.xlu0 %1170
          %v1172 = vrot.slane %v1171, 7
          %v1173 = vsel %vm478, %v1172, %v1171
          %v1175 = vadd.f32 %v1155, %v1173
          %s1176 = sld [smem:[#allocation4 + $0x60]]
          %v1177 = vstv %s1176
          %v1178 = vmul.f32 %v1177, %v440
          %1180 = vrot.lane.b32.xlu0 %v1178, 32
          %v1181 = vpop.permute.xlu0 %1180
          %v1182 = vrot.slane %v1181, 7
          %v1183 = vsel %vm478, %v1182, %v1181
          %v1185 = vadd.f32 %v1165, %v1183
          %v1186 = vadd.f32 %v1175, %v1185
          %vm1187 = vcmp.lt.s32.totalorder %v353, 14
          %1189 = vrot.lane.b32.xlu0 %v1186, 46
          %v1190 = vpop.permute.xlu0 %1189
          %v1191 = vrot.slane %v1190, 1
          %vm1192 = vcmask 375808
          %v1193 = vsel %vm1192, %v1190, %v1191
          %v1195 = vsel %vm1187, %v1193, 0.0
          %v1196 = vadd.f32 %v1057, %v1195
          %s1197 = sld [smem:[#allocation4 + $0x6]]
          %v1198 = vstv %s1197
          %v1199 = vmul.f32 %v1198, %v355
          %v1200 = vadd.f32 %v1199, 0.0
          %s1201 = sld [smem:[#allocation4 + $0x37]]
          %v1202 = vstv %s1201
          %v1203 = vmul.f32 %v1202, %v360
          %v1204 = vadd.f32 %v1203, 0.0
          %s1205 = sld [smem:[#allocation4 + $0xd]]
          %v1206 = vstv %s1205
          %v1207 = vmul.f32 %v1206, %v355
          %1209 = vrot.lane.b32.xlu0 %v1207, 112
          %v1210 = vpop.permute.xlu0 %1209
          %v1211 = vrot.slane %v1210, 1
          %v1212 = vsel %vm371, %v1210, %v1211
          %v1214 = vadd.f32 %v1200, %v1212
          %s1215 = sld [smem:[#allocation4 + $0x3e]]
          %v1216 = vstv %s1215
          %v1217 = vmul.f32 %v1216, %v360
          %1219 = vrot.lane.b32.xlu0 %v1217, 112
          %v1220 = vpop.permute.xlu0 %1219
          %v1221 = vrot.slane %v1220, 1
          %v1222 = vsel %vm371, %v1220, %v1221
          %v1224 = vadd.f32 %v1204, %v1222
          %s1225 = sld [smem:[#allocation4 + $0x14]]
          %v1226 = vstv %s1225
          %v1227 = vmul.f32 %v1226, %v355
          %1229 = vrot.lane.b32.xlu0 %v1227, 96
          %v1230 = vpop.permute.xlu0 %1229
          %v1231 = vrot.slane %v1230, 1
          %v1232 = vsel %vm392, %v1230, %v1231
          %v1234 = vadd.f32 %v1214, %v1232
          %s1235 = sld [smem:[#allocation4 + $0x45]]
          %v1236 = vstv %s1235
          %v1237 = vmul.f32 %v1236, %v360
          %1239 = vrot.lane.b32.xlu0 %v1237, 96
          %v1240 = vpop.permute.xlu0 %1239
          %v1241 = vrot.slane %v1240, 1
          %v1242 = vsel %vm392, %v1240, %v1241
          %v1244 = vadd.f32 %v1224, %v1242
          %s1245 = sld [smem:[#allocation4 + $0x1b]]
          %v1246 = vstv %s1245
          %v1247 = vmul.f32 %v1246, %v428
          %1249 = vrot.lane.b32.xlu0 %v1247, 80
          %v1250 = vpop.permute.xlu0 %1249
          %v1251 = vrot.slane %v1250, 7
          %v1252 = vsel %vm413, %v1251, %v1250
          %v1254 = vadd.f32 %v1234, %v1252
          %s1255 = sld [smem:[#allocation4 + $0x4c]]
          %v1256 = vstv %s1255
          %v1257 = vmul.f32 %v1256, %v440
          %1259 = vrot.lane.b32.xlu0 %v1257, 80
          %v1260 = vpop.permute.xlu0 %1259
          %v1261 = vrot.slane %v1260, 7
          %v1262 = vsel %vm413, %v1261, %v1260
          %v1264 = vadd.f32 %v1244, %v1262
          %s1265 = sld [smem:[#allocation4 + $0x22]]
          %v1266 = vstv %s1265
          %v1267 = vmul.f32 %v1266, %v428
          %1269 = vrot.lane.b32.xlu0 %v1267, 64
          %v1270 = vpop.permute.xlu0 %1269
          %v1271 = vrot.slane %v1270, 7
          %v1272 = vsel %vm435, %v1271, %v1270
          %v1274 = vadd.f32 %v1254, %v1272
          %s1275 = sld [smem:[#allocation4 + $0x53]]
          %v1276 = vstv %s1275
          %v1277 = vmul.f32 %v1276, %v440
          %1279 = vrot.lane.b32.xlu0 %v1277, 64
          %v1280 = vpop.permute.xlu0 %1279
          %v1281 = vrot.slane %v1280, 7
          %v1282 = vsel %vm435, %v1281, %v1280
          %v1284 = vadd.f32 %v1264, %v1282
          %s1285 = sld [smem:[#allocation4 + $0x29]]
          %v1286 = vstv %s1285
          %v1287 = vmul.f32 %v1286, %v428
          %1289 = vrot.lane.b32.xlu0 %v1287, 48
          %v1290 = vpop.permute.xlu0 %1289
          %v1291 = vrot.slane %v1290, 7
          %v1292 = vsel %vm457, %v1291, %v1290
          %v1294 = vadd.f32 %v1274, %v1292
          %s1295 = sld [smem:[#allocation4 + $0x5a]]
          %v1296 = vstv %s1295
          %v1297 = vmul.f32 %v1296, %v440
          %1299 = vrot.lane.b32.xlu0 %v1297, 48
          %v1300 = vpop.permute.xlu0 %1299
          %v1301 = vrot.slane %v1300, 7
          %v1302 = vsel %vm457, %v1301, %v1300
          %v1304 = vadd.f32 %v1284, %v1302
          %s1305 = sld [smem:[#allocation4 + $0x30]]
          %v1306 = vstv %s1305
          %v1307 = vmul.f32 %v1306, %v428
          %1309 = vrot.lane.b32.xlu0 %v1307, 32
          %v1310 = vpop.permute.xlu0 %1309
          %v1311 = vrot.slane %v1310, 7
          %v1312 = vsel %vm478, %v1311, %v1310
          %v1314 = vadd.f32 %v1294, %v1312
          %s1315 = sld [smem:[#allocation4 + $0x61]]
          %v1316 = vstv %s1315
          %v1317 = vmul.f32 %v1316, %v440
          %1319 = vrot.lane.b32.xlu0 %v1317, 32
          %v1320 = vpop.permute.xlu0 %1319
          %v1321 = vrot.slane %v1320, 7
          %v1322 = vsel %vm478, %v1321, %v1320
          %v1324 = vadd.f32 %v1304, %v1322
          %v1325 = vadd.f32 %v1314, %v1324
          %vm1326 = vcmp.lt.s32.totalorder %v353, 13
          %1328 = vrot.lane.b32.xlu0 %v1325, 45
          %v1329 = vpop.permute.xlu0 %1328
          %v1330 = vrot.slane %v1329, 1
          %vm1331 = vcmask 367616
          %v1332 = vsel %vm1331, %v1329, %v1330
          %v1334 = vsel %vm1326, %v1332, 0.0
          %v1335 = vadd.f32 %v1196, %v1334
          %v1336 = vxor.u32 %v1335, 2147483648
          %v1337 = vmul.f32 %v1336, 1.442695
          %v1338 = vpow.pop %v1337
          %v1339 = vadd.f32 %v1338, 1.0
          %v1340 = vrcp.pop %v1339
          %v1341 = vmul.f32 1.0, %v1340
          %v1342 = vlaneseq
          %vm1343 = vcmp.ge.s32.totalorder %v1342, 0
          %vm1344 = vcmp.lt.s32.totalorder %v1342, 256
          %vm1345 = vmand %vm1343, %vm1344
          %1346 = vst.msk [vmem:[%s214] sm:$0x3] %vm1345, %v1341
        $region52: #{tpu_custom_call.1} parent=31 // pred_fallthru
          _
        %s1347 = sand.u32 %s111, 1
        %s1348 = scalar_lea.sflag [#allocation6], %s1347
        %s1349 = sand.u32 %s111, 1
        %s1350 = smul.addr %s1349, 2
        %s1351 = scalar_lea.vmem [#allocation9], %s1350
        // Predicated region
        $region53: #{tpu_custom_call.1} parent=31 // pred_check
          %p1352 = pneg %p121
        $region54: #{tpu_custom_call.1} parent=31 // pred_check_branch
          %1354 = sbr.rel (%p1352) target = $region56
        $region55: #{tpu_custom_call.1} parent=31 // pred_region
          %s1356 = ssub.s32 32, 32
          %1357 = vsyncadd %s1348, %s1356
          %s1358 = smul.addr %s25, 2
          %s1359 = smul.addr %s1358, 16
          %s1360 = scalar_lea.hbm %s3, %s1359
          %s1362 = sshll.u32 %s1351, 4
          %s1363 = int_to_ptr.vmem [resolvable:$true] %s1362
          %1365 = dma.vmem_to_hbm [thread:$0]  %s1363, 32, %s1360, %s1348
        $region56: #{tpu_custom_call.1} parent=31 // pred_fallthru
          _
      $region32: #{tpu_custom_call.1} parent=5 // pred_fallthru
        _
      %p1366 = scmp.le.s32.totalorder 2, %s16
      // Predicated region
      $region57: #{tpu_custom_call.1} parent=5 // pred_check
        %p1367 = pneg %p1366
      $region58: #{tpu_custom_call.1} parent=5 // pred_check_branch
        %1369 = sbr.rel (%p1367) target = $region60
      $region59: #{tpu_custom_call.1} parent=5 // pred_region
        %s1370 = ssub.s32 %s16, 2
        // Predicated region
        $region61: #{tpu_custom_call.1} parent=59 // pred_check
          %p1371 = pneg %p127
        $region62: #{tpu_custom_call.1} parent=59 // pred_check_branch
          %1373 = sbr.rel (%p1371) target = $region64
        $region63: #{tpu_custom_call.1} parent=59 // pred_region
          %s1374 = sand.u32 %s112, 1
          %s1375 = scalar_lea.sflag [#allocation6], %s1374
          %s1376 = sand.u32 %s112, 1
          %s1377 = smul.addr %s1376, 2
          %s1378 = scalar_lea.vmem [#allocation9], %s1377
          %1379 = dma.done %s1375, 32
        $region64: #{tpu_custom_call.1} parent=59 // pred_fallthru
          _
      $region60: #{tpu_custom_call.1} parent=5 // pred_fallthru
        _
    $region6: #{tpu_custom_call.1} parent=1 // loop_footer
      %s20 = sadd.s32 1, %s16
    $region7: #{tpu_custom_call.1} parent=1 // loop_footer_branch
      %15 = sbr.rel target = $region3
    $region8: #{tpu_custom_call.1} parent=1 // loop_exit
      _
    %1380 = vsyncpa [#allocation5], 1
    %s1381 = scalar_lea.sflag [#allocation5], 1
    %1382 = vsyncpa %s1381, 1
    %1383 = vsyncpa [#allocation6], 1
    %s1384 = scalar_lea.sflag [#allocation6], 1
    %1385 = vsyncpa %s1384, 1
    %1386 = vsyncpa [#allocation7], 1
    %s1387 = scalar_lea.sflag [#allocation7], 1
    %1388 = vsyncpa %s1387, 1

</llo_original>
